<compile_context>
chip_gen: v5e
topology: v5e:2x2
jax: 0.10.0
libtpu: 0.0.40
codegen_flags: <defaults>
</compile_context>

<pallas_src>
import jax
import jax.numpy as jnp
from jax import lax
from jax.experimental import pallas as pl
from jax.experimental.pallas import tpu as pltpu


# The recurrent h @ W_hh matmul runs on the MXU in this dtype.  bf16 keeps the
# serial per-timestep chain shortest (default); set to jnp.float32 for closer
# fidelity to the f32 PyTorch LSTM on long sequences, where bf16 rounding of h
# compounds through the recurrence.
_RECURRENT_MM_DTYPE = jnp.bfloat16


# ----------------------------------------------------------------------------
# Pallas kernel: full residual-LSTM stack over one (batch-tile, time-chunk).
#   maxlen_ref : (n_btiles,)   i32  SMEM (scalar prefetch) per-tile max length
#   x_ref      : (TT, H, BB)   f32  input activation chunk (embeddings)
#   wih_ref    : (L, 4H, H)    bf16 fused input weights,  gate rows i|f|o|g
#   whh_ref    : (L, 4H, H)    bf16/f32 fused hidden weights
#   b_ref      : (L, 4H, 1)    f32  fused bias (b_ih + b_hh)
#   len_ref    : (1, BB)       i32  per-sequence lengths (one per lane)
#   y_ref      : (TT, H, BB)   f32  last layer output (+ residual)
#   h_ref/c_ref: (H, BB)       f32  last layer final hidden/cell state
#   h_sc/c_sc  : (L, H, BB)    f32  VMEM scratch, carried across time chunks
#   act_sc     : (TT, H, BB)   f32  VMEM scratch, inter-layer activations
#   xp_sc      : (TT, 4H, BB)  f32  VMEM scratch, hoisted input projections
# ----------------------------------------------------------------------------
def _sbt_lstm_stack_kernel(maxlen_ref, x_ref, wih_ref, whh_ref, b_ref, len_ref,
                           y_ref, h_ref, c_ref, h_sc, c_sc, act_sc, xp_sc):
    TT, H, BB = x_ref.shape
    L, G, _ = wih_ref.shape                    # G = 4H (sublane-fused gates)

    b_tile = pl.program_id(0)
    t_chunk = pl.program_id(1)

    @pl.when(t_chunk == 0)
    def _init():
        h_sc[...] = jnp.zeros(h_sc.shape, jnp.float32)
        c_sc[...] = jnp.zeros(c_sc.shape, jnp.float32)

    t0 = t_chunk * TT
    # Timesteps of this chunk that are live for at least one sequence of this
    # batch tile (scalar from SMEM) -> dynamic trip counts skip padded work.
    n_steps = jnp.minimum(jnp.maximum(maxlen_ref[b_tile] - t0, 0), TT)

    lengths = len_ref[...]                     # (1, BB) i32, one len per lane

    # Tail t >= n_steps: every sequence of this tile is past its length, so
    # every layer passes the input straight through (pad value 0 + skip = x).
    @pl.loop(n_steps, TT)
    def _tail(t):
        y_ref[t] = x_ref[t]

    @pl.when(n_steps > 0)                      # skip fully-padded chunks
    def _compute():
        for l in range(L):                     # static unroll over the layers
            src = x_ref if l == 0 else act_sc
            dst = y_ref if l == L - 1 else act_sc
            # Grid-invariant weights: fetched once by the pipeline (constant
            # index map); pl.Buffered(1) would only reclaim ~32 KiB, skipped.
            wih_l = wih_ref[l]                 # (4H, H) bf16
            whh_l = whh_ref[l]                 # (4H, H) bf16 or f32
            b_l = b_ref[l]                     # (4H, 1) f32

            # Hoisted input projection: independent per-t MXU matmuls, off the
            # serial recurrence chain; results spilled to xp_sc scratch.
            @pl.loop(0, n_steps)
            def _proj(t):
                xp_sc[t] = (jnp.dot(wih_l, src[t].astype(jnp.bfloat16),
                                    preferred_element_type=jnp.float32) + b_l)

            # Serial recurrence: ONE (4H,H)@(H,BB) MXU matmul per step.  All
            # elementwise state math is lane-dense (BB = 128 lanes) and every
            # gate slice is sublane-aligned, so no cross-lane XLU work.
            # Note: for intermediate layers src is dst (in place); src[t] is
            # read before dst[t] is written within each step (data dep).
            @pl.loop(0, n_steps)
            def _step(t):
                h = h_sc[l]                    # (H, BB) f32
                c = c_sc[l]
                gates = xp_sc[t] + jnp.dot(whh_l, h.astype(whh_l.dtype),
                                           preferred_element_type=jnp.float32)
                # sigmoid(x) = 0.5*tanh(0.5x)+0.5 : one EUP push for i|f|o.
                ifo = 0.5 * jnp.tanh(0.5 * gates[:3 * H]) + 0.5
                g = jnp.tanh(gates[3 * H:])
                c_new = ifo[H:2 * H] * c + ifo[:H] * g
                h_new = ifo[2 * H:] * jnp.tanh(c_new)
                valid = (t0 + t) < lengths     # (1, BB) lane mask
                # pad_packed_sequence pads with zeros; then "+ skip".
                dst[t] = jnp.where(valid, h_new, 0.0) + src[t]
                h_sc[l] = jnp.where(valid, h_new, h)
                c_sc[l] = jnp.where(valid, c_new, c)

    @pl.when(t_chunk == pl.num_programs(1) - 1)
    def _finalize():
        h_ref[...] = h_sc[L - 1]               # last layer's final h, c
        c_ref[...] = c_sc[L - 1]


def lstm_stack(x, wih, whh, bias, len_row, tile_max, *, tt=64, bb=128):
    """x: (Tp,H,Bp) f32; wih/whh: (L,4H,H); bias: (L,4H,1) f32;
    len_row: (1,Bp) i32; tile_max: (Bp//bb,) i32.  Tp%tt==0, Bp%bb==0,
    bb a multiple of 128 (lane-dense batch)."""
    Tp, H, Bp = x.shape
    L, G, _ = wih.shape
    assert Tp % tt == 0 and Bp % bb == 0 and bb % 128 == 0 and H % 8 == 0
    grid = (Bp // bb, Tp // tt)                # (batch tiles, time chunks)

    return pl.pallas_call(
        _sbt_lstm_stack_kernel,
        out_shape=(jax.ShapeDtypeStruct((Tp, H, Bp), jnp.float32),   # y
                   jax.ShapeDtypeStruct((H, Bp), jnp.float32),       # h_T
                   jax.ShapeDtypeStruct((H, Bp), jnp.float32)),      # c_T
        grid_spec=pltpu.PrefetchScalarGridSpec(
            num_scalar_prefetch=1,             # tile_max -> SMEM
            grid=grid,
            in_specs=[
                pl.BlockSpec((tt, H, bb), lambda b, t, mx: (t, 0, b)),  # x
                pl.BlockSpec((L, G, H), lambda b, t, mx: (0, 0, 0)),    # W_ih
                pl.BlockSpec((L, G, H), lambda b, t, mx: (0, 0, 0)),    # W_hh
                pl.BlockSpec((L, G, 1), lambda b, t, mx: (0, 0, 0)),    # bias
                pl.BlockSpec((1, bb), lambda b, t, mx: (0, b)),         # lens
            ],
            out_specs=(
                pl.BlockSpec((tt, H, bb), lambda b, t, mx: (t, 0, b)),  # y
                pl.BlockSpec((H, bb), lambda b, t, mx: (0, b)),         # h_T
                pl.BlockSpec((H, bb), lambda b, t, mx: (0, b)),         # c_T
            ),
            scratch_shapes=[
                pltpu.VMEM((L, H, bb), jnp.float32),                 # h carry
                pltpu.VMEM((L, H, bb), jnp.float32),                 # c carry
                pltpu.VMEM((tt, H, bb), jnp.float32),                # act
                pltpu.VMEM((tt, G, bb), jnp.float32),                # xp (gates)
            ]),
        compiler_params=pltpu.CompilerParams(
            dimension_semantics=("parallel", "arbitrary"),
            vmem_limit_bytes=32 * 1024 * 1024),
    )(tile_max, x, wih, whh, bias, len_row)


# ----------------------------------------------------------------------------
# Full forward (glue in plain JAX: embedding gather, layout, padding, slicing)
# ----------------------------------------------------------------------------
def sbt_encoder_forward(params, in1_pad, in2_pad, lengths, *, tt=64, bb=128):
    """in1_pad, in2_pad: (T, B) int32 padded token ids; lengths: (B,) int32."""
    T, B = in1_pad.shape
    H = params["emb_t"].shape[1]
    # TODO(synk): embedding gather + add left to XLA (tables are ~9 KiB); could
    # optionally be fused into the kernel to save one HBM round trip of x.
    x = params["emb_t"][in1_pad] + params["emb_v"][in2_pad]          # (T,B,H)
    x = jnp.transpose(x, (0, 2, 1))                                  # (T,H,B)

    # Pad time to the chunk size and batch to a lane-dense multiple of bb.
    # Padded batch lanes get length 0, so the in-kernel mask keeps them inert.
    Tp = ((T + tt - 1) // tt) * tt
    Bp = ((B + bb - 1) // bb) * bb
    x_p = jnp.zeros((Tp, H, Bp), jnp.float32).at[:T, :, :B].set(x)
    len_row = jnp.zeros((1, Bp), jnp.int32).at[0, :B].set(lengths.astype(jnp.int32))
    tile_max = jnp.max(len_row.reshape(Bp // bb, bb), axis=1).astype(jnp.int32)

    y, h, c = lstm_stack(x_p,
                         params["wih"].astype(jnp.bfloat16),
                         params["whh"].astype(_RECURRENT_MM_DTYPE),
                         params["bias"], len_row, tile_max, tt=tt, bb=bb)
    y = jnp.transpose(y[:T, :, :B], (0, 2, 1))                       # (T,B,H)
    # PyTorch LSTM returns h, c with shape (num_layers*num_dirs=1, B, H).
    hx = jnp.transpose(h[:, :B], (1, 0))[None]
    cx = jnp.transpose(c[:, :B], (1, 0))[None]
    return y, hx, cx


# Pure-JAX reference (lax.scan, f32 HIGHEST precision) for a sanity check.
def sbt_encoder_reference(params, in1_pad, in2_pad, lengths):
    x = params["emb_t"][in1_pad] + params["emb_v"][in2_pad]
    T, B, H = x.shape
    lens = lengths.reshape(-1, 1)
    L = params["wih"].shape[0]
    h = c = None
    for l in range(L):
        wih = params["wih"][l]                 # (4H, H), rows i|f|o|g
        whh = params["whh"][l]
        bias = params["bias"][l][:, 0]         # (4H,)

        def step(carry, inp, wih=wih, whh=whh, bias=bias):
            h, c = carry
            x_t, t = inp
            gates = (jnp.dot(x_t, wih.T, precision=lax.Precision.HIGHEST)
                     + jnp.dot(h, whh.T, precision=lax.Precision.HIGHEST) + bias)
            i = jax.nn.sigmoid(gates[:, :H])
            f = jax.nn.sigmoid(gates[:, H:2 * H])
            o = jax.nn.sigmoid(gates[:, 2 * H:3 * H])
            g = jnp.tanh(gates[:, 3 * H:])
            c_new = f * c + i * g
            h_new = o * jnp.tanh(c_new)
            valid = t < lens
            y = jnp.where(valid, h_new, 0.0) + x_t
            return (jnp.where(valid, h_new, h), jnp.where(valid, c_new, c)), y

        (h, c), x = lax.scan(step,
                             (jnp.zeros((B, H), jnp.float32),
                              jnp.zeros((B, H), jnp.float32)),
                             (x, jnp.arange(T)))
    return x, h[None], c[None]


# ----------------------------------------------------------------------------
# Deterministic parameter init (shapes from SBTEncoder.__init__).  PyTorch
# packs LSTM gate rows as (i, f, g, o); we re-pack the fused (4H, H) weights as
# (i, f, o, g) so sigmoid applies to one contiguous 3H sublane slab.
# ----------------------------------------------------------------------------
def init_params(key, dict_size_1, dict_size_2, model_size, num_layer):
    H = model_size
    keys = jax.random.split(key, 2 + 4 * num_layer)
    emb_t = 0.1 * jax.random.normal(keys[0], (dict_size_2, H), jnp.float32)
    emb_v = 0.1 * jax.random.normal(keys[1], (dict_size_1, H), jnp.float32)

    order = (0, 1, 3, 2)            # i, f, o, g  (indices into torch i,f,g,o)
    wih_l, whh_l, b_l = [], [], []
    k = 2
    for _ in range(num_layer):
        W_ih = 0.1 * jax.random.normal(keys[k + 0], (4 * H, H), jnp.float32)
        W_hh = 0.1 * jax.random.normal(keys[k + 1], (4 * H, H), jnp.float32)
        b_ih = 0.1 * jax.random.normal(keys[k + 2], (4 * H,), jnp.float32)
        b_hh = 0.1 * jax.random.normal(keys[k + 3], (4 * H,), jnp.float32)
        k += 4
        wih = jnp.concatenate([W_ih[g * H:(g + 1) * H] for g in order], axis=0)
        whh = jnp.concatenate([W_hh[g * H:(g + 1) * H] for g in order], axis=0)
        bias = jnp.concatenate([b_ih[g * H:(g + 1) * H] + b_hh[g * H:(g + 1) * H]
                                for g in order]).reshape(4 * H, 1)
        wih_l.append(wih); whh_l.append(whh); b_l.append(bias)

    return {"emb_t": emb_t, "emb_v": emb_v,
            "wih": jnp.stack(wih_l),        # (L, 4H, H) f32
            "whh": jnp.stack(whh_l),        # (L, 4H, H) f32
            "bias": jnp.stack(b_l)}         # (L, 4H, 1) f32


if __name__ == "__main__":
    # Small config consistent with the module's forward.
    DICT_SIZE_1, DICT_SIZE_2 = 40, 30
    MODEL_SIZE, NUM_LAYER = 32, 2
    B = 2
    lengths_list = [8, 5]
    T = max(lengths_list)

    key = jax.random.PRNGKey(0)
    kp, k1, k2 = jax.random.split(key, 3)
    params = init_params(kp, DICT_SIZE_1, DICT_SIZE_2, MODEL_SIZE, NUM_LAYER)

    lengths = jnp.array(lengths_list, dtype=jnp.int32)                    # (B,)
    valid_mask = jnp.arange(T)[:, None] < lengths[None, :]                # (T,B)
    # Variable-length token sequences, padded with 0 (= pad_sequence default).
    in1_pad = jnp.where(valid_mask,
                        jax.random.randint(k1, (T, B), 0, DICT_SIZE_2), 0
                        ).astype(jnp.int32)
    in2_pad = jnp.where(valid_mask,
                        jax.random.randint(k2, (T, B), 0, DICT_SIZE_1), 0
                        ).astype(jnp.int32)

    fwd = jax.jit(sbt_encoder_forward)
    tensor, hx, cx = fwd(params, in1_pad, in2_pad, lengths)
    jax.block_until_ready((tensor, hx, cx))

    # ys = [y[:len_b] for each batch element]  (glue, like the torch unbind)
    ys = [tensor[:lengths_list[b], b, :] for b in range(B)]

    # Sanity check against the pure-JAX f32 reference (kernel uses bf16 MXU
    # operands with f32 accumulation, so allow a slightly looser tolerance).
    ref_tensor, ref_h, ref_c = sbt_encoder_reference(params, in1_pad, in2_pad,
                                                     lengths)
    assert all(bool(jnp.allclose(a, b, atol=2e-2, rtol=2e-2))
               for a, b in ((tensor, ref_tensor), (hx, ref_h), (cx, ref_c)))
    assert hx.shape == (1, B, MODEL_SIZE) and cx.shape == (1, B, MODEL_SIZE)
    assert [y.shape for y in ys] == [(l, MODEL_SIZE) for l in lengths_list]

    print("KERNEL_OK")
</pallas_src>

<mosaic_0001>
module attributes {stable_mosaic.version = 11 : i64} {
  func.func @_sbt_lstm_stack_kernel(%arg0: i32, %arg1: i32, %arg2: memref<1xi32, #tpu.memory_space<smem>>, %arg3: memref<64x32x128xf32, #tpu.memory_space<vmem>>, %arg4: memref<2x128x32xbf16, #tpu.memory_space<vmem>>, %arg5: memref<2x128x32xbf16, #tpu.memory_space<vmem>>, %arg6: memref<2x128x1xf32, #tpu.memory_space<vmem>>, %arg7: memref<1x128xi32, #tpu.memory_space<vmem>>, %arg8: memref<64x32x128xf32, #tpu.memory_space<vmem>>, %arg9: memref<32x128xf32, #tpu.memory_space<vmem>>, %arg10: memref<32x128xf32, #tpu.memory_space<vmem>>, %arg11: memref<2x32x128xf32, #tpu.memory_space<vmem>>, %arg12: memref<2x32x128xf32, #tpu.memory_space<vmem>>, %arg13: memref<64x32x128xf32, #tpu.memory_space<vmem>>, %arg14: memref<64x128x128xf32, #tpu.memory_space<vmem>>) attributes {dimension_semantics = [#tpu.dimension_semantics<parallel>, #tpu.dimension_semantics<arbitrary>], iteration_bounds = array<i64: 1, 1>, scalar_prefetch = 1 : i64, scratch_operands = 4 : i64, tpu.core_type = #tpu.core_type<tc>, window_params = [{transform_indices = @transform_0, window_bounds = array<i64: 64, 32, 128>}, {pipeline_mode = #tpu.pipeline_mode<synchronous>, transform_indices = @transform_1, window_bounds = array<i64: 2, 128, 32>}, {pipeline_mode = #tpu.pipeline_mode<synchronous>, transform_indices = @transform_2, window_bounds = array<i64: 2, 128, 32>}, {pipeline_mode = #tpu.pipeline_mode<synchronous>, transform_indices = @transform_3, window_bounds = array<i64: 2, 128, 1>}, {transform_indices = @transform_4, window_bounds = array<i64: 1, 128>}, {transform_indices = @transform_5, window_bounds = array<i64: 64, 32, 128>}, {transform_indices = @transform_6, window_bounds = array<i64: 32, 128>}, {transform_indices = @transform_7, window_bounds = array<i64: 32, 128>}]} {
    %c0_i32 = arith.constant 0 : i32
    %0 = arith.cmpi eq, %arg1, %c0_i32 : i32
    %1 = arith.extui %0 : i1 to i32
    %c0_i32_0 = arith.constant 0 : i32
    %2 = arith.cmpi ne, %1, %c0_i32_0 : i32
    scf.if %2 {
      %cst = arith.constant 0.000000e+00 : f32
      %22 = vector.broadcast %cst : f32 to vector<2x32x128xf32>
      %c0_14 = arith.constant 0 : index
      %c0_15 = arith.constant 0 : index
      %c0_16 = arith.constant 0 : index
      %23 = vector.load %arg11[%c0_14, %c0_15, %c0_16] : memref<2x32x128xf32, #tpu.memory_space<vmem>>, vector<2x32x128xf32>
      tpu.vector_store %arg11[%c0_14, %c0_15, %c0_16], %22 {strides = array<i32>} : memref<2x32x128xf32, #tpu.memory_space<vmem>>, vector<2x32x128xf32>,
      %cst_17 = arith.constant 0.000000e+00 : f32
      %24 = vector.broadcast %cst_17 : f32 to vector<2x32x128xf32>
      %c0_18 = arith.constant 0 : index
      %c0_19 = arith.constant 0 : index
      %c0_20 = arith.constant 0 : index
      %25 = vector.load %arg12[%c0_18, %c0_19, %c0_20] : memref<2x32x128xf32, #tpu.memory_space<vmem>>, vector<2x32x128xf32>
      tpu.vector_store %arg12[%c0_18, %c0_19, %c0_20], %24 {strides = array<i32>} : memref<2x32x128xf32, #tpu.memory_space<vmem>>, vector<2x32x128xf32>,
    } else {
    }
    %c64_i32 = arith.constant 64 : i32
    %3 = arith.muli %arg1, %c64_i32 : i32
    %4 = arith.index_cast %arg0 : i32 to index
    %5 = memref.load %arg2[%4] : memref<1xi32, #tpu.memory_space<smem>>
    %6 = arith.subi %5, %3 : i32
    %c0_i32_1 = arith.constant 0 : i32
    %7 = arith.maxsi %6, %c0_i32_1 : i32
    %c64_i32_2 = arith.constant 64 : i32
    %8 = arith.minsi %7, %c64_i32_2 : i32
    %c0 = arith.constant 0 : index
    %c0_3 = arith.constant 0 : index
    %9 = vector.load %arg7[%c0, %c0_3] : memref<1x128xi32, #tpu.memory_space<vmem>>, vector<1x128xi32>
    %c64_i32_4 = arith.constant 64 : i32
    %10 = arith.subi %c64_i32_4, %8 : i32
    %c1_i32 = arith.constant 1 : i32
    %c1_i32_5 = arith.constant 1 : i32
    %11 = arith.subi %c1_i32, %c1_i32_5 : i32
    %12 = arith.addi %10, %11 : i32
    %c1_i32_6 = arith.constant 1 : i32
    %13 = arith.divsi %12, %c1_i32_6 : i32
    %c1_i32_7 = arith.constant 1 : i32
    %c0_i32_8 = arith.constant 0 : i32
    %14 = arith.subi %13, %c0_i32_8 : i32
    %15 = arith.addi %c0_i32_8, %14 : i32
    %c1_i32_9 = arith.constant 1 : i32
    scf.for %arg15 = %c0_i32_8 to %15 step %c1_i32_9  : i32 {
      %22 = arith.muli %arg15, %c1_i32_7 : i32
      %23 = arith.addi %8, %22 : i32
      %24 = arith.index_cast %23 : i32 to index
      %c0_14 = arith.constant 0 : index
      %c0_15 = arith.constant 0 : index
      %25 = vector.load %arg3[%24, %c0_14, %c0_15] : memref<64x32x128xf32, #tpu.memory_space<vmem>>, vector<1x32x128xf32>
      %26 = vector.shape_cast %25 : vector<1x32x128xf32> to vector<32x128xf32>
      %27 = arith.index_cast %23 : i32 to index
      %c0_16 = arith.constant 0 : index
      %c0_17 = arith.constant 0 : index
      %28 = vector.load %arg8[%27, %c0_16, %c0_17] : memref<64x32x128xf32, #tpu.memory_space<vmem>>, vector<1x32x128xf32>
      %29 = vector.shape_cast %28 : vector<1x32x128xf32> to vector<32x128xf32>
      %30 = vector.shape_cast %26 : vector<32x128xf32> to vector<1x32x128xf32>
      tpu.vector_store %arg8[%27, %c0_16, %c0_17], %30 {strides = array<i32>} : memref<64x32x128xf32, #tpu.memory_space<vmem>>, vector<1x32x128xf32>,
    }
    %c0_i32_10 = arith.constant 0 : i32
    %16 = arith.cmpi sgt, %8, %c0_i32_10 : i32
    %17 = arith.extui %16 : i1 to i32
    %c0_i32_11 = arith.constant 0 : i32
    %18 = arith.cmpi ne, %17, %c0_i32_11 : i32
    scf.if %18 {
      %c0_14 = arith.constant 0 : index
      %c0_15 = arith.constant 0 : index
      %c0_16 = arith.constant 0 : index
      %22 = vector.load %arg4[%c0_14, %c0_15, %c0_16] : memref<2x128x32xbf16, #tpu.memory_space<vmem>>, vector<1x128x32xbf16>
      %23 = vector.shape_cast %22 : vector<1x128x32xbf16> to vector<128x32xbf16>
      %c0_17 = arith.constant 0 : index
      %c0_18 = arith.constant 0 : index
      %c0_19 = arith.constant 0 : index
      %24 = vector.load %arg5[%c0_17, %c0_18, %c0_19] : memref<2x128x32xbf16, #tpu.memory_space<vmem>>, vector<1x128x32xbf16>
      %25 = vector.shape_cast %24 : vector<1x128x32xbf16> to vector<128x32xbf16>
      %c0_20 = arith.constant 0 : index
      %c0_21 = arith.constant 0 : index
      %c0_22 = arith.constant 0 : index
      %26 = vector.load %arg6[%c0_20, %c0_21, %c0_22] : memref<2x128x1xf32, #tpu.memory_space<vmem>>, vector<1x128x1xf32>
      %27 = vector.shape_cast %26 : vector<1x128x1xf32> to vector<128x1xf32>
      %c0_i32_23 = arith.constant 0 : i32
      %28 = arith.subi %8, %c0_i32_23 : i32
      %c1_i32_24 = arith.constant 1 : i32
      %c1_i32_25 = arith.constant 1 : i32
      %29 = arith.subi %c1_i32_24, %c1_i32_25 : i32
      %30 = arith.addi %28, %29 : i32
      %c1_i32_26 = arith.constant 1 : i32
      %31 = arith.divsi %30, %c1_i32_26 : i32
      %c1_i32_27 = arith.constant 1 : i32
      %c0_i32_28 = arith.constant 0 : i32
      %c0_i32_29 = arith.constant 0 : i32
      %32 = arith.subi %31, %c0_i32_29 : i32
      %33 = arith.addi %c0_i32_29, %32 : i32
      %c1_i32_30 = arith.constant 1 : i32
      scf.for %arg15 = %c0_i32_29 to %33 step %c1_i32_30  : i32 {
        %58 = arith.muli %arg15, %c1_i32_27 : i32
        %59 = arith.addi %c0_i32_28, %58 : i32
        %60 = arith.index_cast %59 : i32 to index
        %c0_63 = arith.constant 0 : index
        %c0_64 = arith.constant 0 : index
        %61 = vector.load %arg3[%60, %c0_63, %c0_64] : memref<64x32x128xf32, #tpu.memory_space<vmem>>, vector<1x32x128xf32>
        %62 = vector.shape_cast %61 : vector<1x32x128xf32> to vector<32x128xf32>
        %63 = arith.truncf %62 : vector<32x128xf32> to vector<32x128xbf16>
        %cst = arith.constant dense<0.000000e+00> : vector<128x128xf32>
        %64 = tpu.matmul %23, %63, %cst {dimension_numbers = #tpu.dot_dimension_numbers<[1], [0], [0], [1], [0, 0, 1, 1], [], []>} : vector<128x32xbf16>, vector<32x128xbf16>, vector<128x128xf32> -> vector<128x128xf32>
        %65 = vector.broadcast %27 : vector<128x1xf32> to vector<128x128xf32>
        %66 = arith.addf %64, %65 : vector<128x128xf32>
        %67 = arith.index_cast %59 : i32 to index
        %c0_65 = arith.constant 0 : index
        %c0_66 = arith.constant 0 : index
        %68 = vector.load %arg14[%67, %c0_65, %c0_66] : memref<64x128x128xf32, #tpu.memory_space<vmem>>, vector<1x128x128xf32>
        %69 = vector.shape_cast %68 : vector<1x128x128xf32> to vector<128x128xf32>
        %70 = vector.shape_cast %66 : vector<128x128xf32> to vector<1x128x128xf32>
        tpu.vector_store %arg14[%67, %c0_65, %c0_66], %70 {strides = array<i32>} : memref<64x128x128xf32, #tpu.memory_space<vmem>>, vector<1x128x128xf32>,
      }
      %c0_i32_31 = arith.constant 0 : i32
      %34 = arith.subi %8, %c0_i32_31 : i32
      %c1_i32_32 = arith.constant 1 : i32
      %c1_i32_33 = arith.constant 1 : i32
      %35 = arith.subi %c1_i32_32, %c1_i32_33 : i32
      %36 = arith.addi %34, %35 : i32
      %c1_i32_34 = arith.constant 1 : i32
      %37 = arith.divsi %36, %c1_i32_34 : i32
      %c1_i32_35 = arith.constant 1 : i32
      %c0_i32_36 = arith.constant 0 : i32
      %c0_i32_37 = arith.constant 0 : i32
      %38 = arith.subi %37, %c0_i32_37 : i32
      %39 = arith.addi %c0_i32_37, %38 : i32
      %c1_i32_38 = arith.constant 1 : i32
      scf.for %arg15 = %c0_i32_37 to %39 step %c1_i32_38  : i32 {
        %58 = arith.muli %arg15, %c1_i32_35 : i32
        %59 = arith.addi %c0_i32_36, %58 : i32
        %c0_63 = arith.constant 0 : index
        %c0_64 = arith.constant 0 : index
        %c0_65 = arith.constant 0 : index
        %60 = vector.load %arg11[%c0_63, %c0_64, %c0_65] : memref<2x32x128xf32, #tpu.memory_space<vmem>>, vector<1x32x128xf32>
        %61 = vector.shape_cast %60 : vector<1x32x128xf32> to vector<32x128xf32>
        %c0_66 = arith.constant 0 : index
        %c0_67 = arith.constant 0 : index
        %c0_68 = arith.constant 0 : index
        %62 = vector.load %arg12[%c0_66, %c0_67, %c0_68] : memref<2x32x128xf32, #tpu.memory_space<vmem>>, vector<1x32x128xf32>
        %63 = vector.shape_cast %62 : vector<1x32x128xf32> to vector<32x128xf32>
        %64 = arith.index_cast %59 : i32 to index
        %c0_69 = arith.constant 0 : index
        %c0_70 = arith.constant 0 : index
        %65 = vector.load %arg14[%64, %c0_69, %c0_70] : memref<64x128x128xf32, #tpu.memory_space<vmem>>, vector<1x128x128xf32>
        %66 = vector.shape_cast %65 : vector<1x128x128xf32> to vector<128x128xf32>
        %67 = arith.truncf %61 : vector<32x128xf32> to vector<32x128xbf16>
        %cst = arith.constant dense<0.000000e+00> : vector<128x128xf32>
        %68 = tpu.matmul %25, %67, %cst {dimension_numbers = #tpu.dot_dimension_numbers<[1], [0], [0], [1], [0, 0, 1, 1], [], []>} : vector<128x32xbf16>, vector<32x128xbf16>, vector<128x128xf32> -> vector<128x128xf32>
        %69 = arith.addf %66, %68 : vector<128x128xf32>
        %70 = vector.extract_strided_slice %69 {offsets = [0, 0], sizes = [96, 128], strides = [1, 1]} : vector<128x128xf32> to vector<96x128xf32>
        %cst_71 = arith.constant 5.000000e-01 : f32
        %71 = vector.broadcast %cst_71 : f32 to vector<96x128xf32>
        %72 = arith.mulf %71, %70 : vector<96x128xf32>
        %73 = math.tanh %72 : vector<96x128xf32>
        %cst_72 = arith.constant 5.000000e-01 : f32
        %74 = vector.broadcast %cst_72 : f32 to vector<96x128xf32>
        %75 = arith.mulf %74, %73 : vector<96x128xf32>
        %cst_73 = arith.constant 5.000000e-01 : f32
        %76 = vector.broadcast %cst_73 : f32 to vector<96x128xf32>
        %77 = arith.addf %75, %76 : vector<96x128xf32>
        %78 = vector.extract_strided_slice %69 {offsets = [96, 0], sizes = [32, 128], strides = [1, 1]} : vector<128x128xf32> to vector<32x128xf32>
        %79 = math.tanh %78 : vector<32x128xf32>
        %80 = vector.extract_strided_slice %77 {offsets = [32, 0], sizes = [32, 128], strides = [1, 1]} : vector<96x128xf32> to vector<32x128xf32>
        %81 = arith.mulf %80, %63 : vector<32x128xf32>
        %82 = vector.extract_strided_slice %77 {offsets = [0, 0], sizes = [32, 128], strides = [1, 1]} : vector<96x128xf32> to vector<32x128xf32>
        %83 = arith.mulf %82, %79 : vector<32x128xf32>
        %84 = arith.addf %81, %83 : vector<32x128xf32>
        %85 = vector.extract_strided_slice %77 {offsets = [64, 0], sizes = [32, 128], strides = [1, 1]} : vector<96x128xf32> to vector<32x128xf32>
        %86 = math.tanh %84 : vector<32x128xf32>
        %87 = arith.mulf %85, %86 : vector<32x128xf32>
        %88 = arith.addi %3, %59 : i32
        %89 = vector.broadcast %88 : i32 to vector<1x128xi32>
        %90 = arith.cmpi slt, %89, %9 : vector<1x128xi32>
        %cst_74 = arith.constant 0.000000e+00 : f32
        %91 = vector.shape_cast %90 : vector<1x128xi1> to vector<1x128xi1>
        %92 = vector.broadcast %91 : vector<1x128xi1> to vector<32x128xi1>
        %93 = vector.broadcast %cst_74 : f32 to vector<32x128xf32>
        %94 = arith.select %92, %87, %93 : vector<32x128xi1>, vector<32x128xf32>
        %95 = arith.index_cast %59 : i32 to index
        %c0_75 = arith.constant 0 : index
        %c0_76 = arith.constant 0 : index
        %96 = vector.load %arg3[%95, %c0_75, %c0_76] : memref<64x32x128xf32, #tpu.memory_space<vmem>>, vector<1x32x128xf32>
        %97 = vector.shape_cast %96 : vector<1x32x128xf32> to vector<32x128xf32>
        %98 = arith.addf %94, %97 : vector<32x128xf32>
        %99 = arith.index_cast %59 : i32 to index
        %c0_77 = arith.constant 0 : index
        %c0_78 = arith.constant 0 : index
        %100 = vector.load %arg13[%99, %c0_77, %c0_78] : memref<64x32x128xf32, #tpu.memory_space<vmem>>, vector<1x32x128xf32>
        %101 = vector.shape_cast %100 : vector<1x32x128xf32> to vector<32x128xf32>
        %102 = vector.shape_cast %98 : vector<32x128xf32> to vector<1x32x128xf32>
        tpu.vector_store %arg13[%99, %c0_77, %c0_78], %102 {strides = array<i32>} : memref<64x32x128xf32, #tpu.memory_space<vmem>>, vector<1x32x128xf32>,
        %103 = vector.shape_cast %90 : vector<1x128xi1> to vector<1x128xi1>
        %104 = vector.broadcast %103 : vector<1x128xi1> to vector<32x128xi1>
        %105 = arith.select %104, %87, %61 : vector<32x128xi1>, vector<32x128xf32>
        %c0_79 = arith.constant 0 : index
        %c0_80 = arith.constant 0 : index
        %c0_81 = arith.constant 0 : index
        %106 = vector.load %arg11[%c0_79, %c0_80, %c0_81] : memref<2x32x128xf32, #tpu.memory_space<vmem>>, vector<1x32x128xf32>
        %107 = vector.shape_cast %106 : vector<1x32x128xf32> to vector<32x128xf32>
        %108 = vector.shape_cast %105 : vector<32x128xf32> to vector<1x32x128xf32>
        tpu.vector_store %arg11[%c0_79, %c0_80, %c0_81], %108 {strides = array<i32>} : memref<2x32x128xf32, #tpu.memory_space<vmem>>, vector<1x32x128xf32>,
        %109 = vector.shape_cast %90 : vector<1x128xi1> to vector<1x128xi1>
        %110 = vector.broadcast %109 : vector<1x128xi1> to vector<32x128xi1>
        %111 = arith.select %110, %84, %63 : vector<32x128xi1>, vector<32x128xf32>
        %c0_82 = arith.constant 0 : index
        %c0_83 = arith.constant 0 : index
        %c0_84 = arith.constant 0 : index
        %112 = vector.load %arg12[%c0_82, %c0_83, %c0_84] : memref<2x32x128xf32, #tpu.memory_space<vmem>>, vector<1x32x128xf32>
        %113 = vector.shape_cast %112 : vector<1x32x128xf32> to vector<32x128xf32>
        %114 = vector.shape_cast %111 : vector<32x128xf32> to vector<1x32x128xf32>
        tpu.vector_store %arg12[%c0_82, %c0_83, %c0_84], %114 {strides = array<i32>} : memref<2x32x128xf32, #tpu.memory_space<vmem>>, vector<1x32x128xf32>,
      }
      %c1 = arith.constant 1 : index
      %c0_39 = arith.constant 0 : index
      %c0_40 = arith.constant 0 : index
      %40 = vector.load %arg4[%c1, %c0_39, %c0_40] : memref<2x128x32xbf16, #tpu.memory_space<vmem>>, vector<1x128x32xbf16>
      %41 = vector.shape_cast %40 : vector<1x128x32xbf16> to vector<128x32xbf16>
      %c1_41 = arith.constant 1 : index
      %c0_42 = arith.constant 0 : index
      %c0_43 = arith.constant 0 : index
      %42 = vector.load %arg5[%c1_41, %c0_42, %c0_43] : memref<2x128x32xbf16, #tpu.memory_space<vmem>>, vector<1x128x32xbf16>
      %43 = vector.shape_cast %42 : vector<1x128x32xbf16> to vector<128x32xbf16>
      %c1_44 = arith.constant 1 : index
      %c0_45 = arith.constant 0 : index
      %c0_46 = arith.constant 0 : index
      %44 = vector.load %arg6[%c1_44, %c0_45, %c0_46] : memref<2x128x1xf32, #tpu.memory_space<vmem>>, vector<1x128x1xf32>
      %45 = vector.shape_cast %44 : vector<1x128x1xf32> to vector<128x1xf32>
      %c0_i32_47 = arith.constant 0 : i32
      %46 = arith.subi %8, %c0_i32_47 : i32
      %c1_i32_48 = arith.constant 1 : i32
      %c1_i32_49 = arith.constant 1 : i32
      %47 = arith.subi %c1_i32_48, %c1_i32_49 : i32
      %48 = arith.addi %46, %47 : i32
      %c1_i32_50 = arith.constant 1 : i32
      %49 = arith.divsi %48, %c1_i32_50 : i32
      %c1_i32_51 = arith.constant 1 : i32
      %c0_i32_52 = arith.constant 0 : i32
      %c0_i32_53 = arith.constant 0 : i32
      %50 = arith.subi %49, %c0_i32_53 : i32
      %51 = arith.addi %c0_i32_53, %50 : i32
      %c1_i32_54 = arith.constant 1 : i32
      scf.for %arg15 = %c0_i32_53 to %51 step %c1_i32_54  : i32 {
        %58 = arith.muli %arg15, %c1_i32_51 : i32
        %59 = arith.addi %c0_i32_52, %58 : i32
        %60 = arith.index_cast %59 : i32 to index
        %c0_63 = arith.constant 0 : index
        %c0_64 = arith.constant 0 : index
        %61 = vector.load %arg13[%60, %c0_63, %c0_64] : memref<64x32x128xf32, #tpu.memory_space<vmem>>, vector<1x32x128xf32>
        %62 = vector.shape_cast %61 : vector<1x32x128xf32> to vector<32x128xf32>
        %63 = arith.truncf %62 : vector<32x128xf32> to vector<32x128xbf16>
        %cst = arith.constant dense<0.000000e+00> : vector<128x128xf32>
        %64 = tpu.matmul %41, %63, %cst {dimension_numbers = #tpu.dot_dimension_numbers<[1], [0], [0], [1], [0, 0, 1, 1], [], []>} : vector<128x32xbf16>, vector<32x128xbf16>, vector<128x128xf32> -> vector<128x128xf32>
        %65 = vector.broadcast %45 : vector<128x1xf32> to vector<128x128xf32>
        %66 = arith.addf %64, %65 : vector<128x128xf32>
        %67 = arith.index_cast %59 : i32 to index
        %c0_65 = arith.constant 0 : index
        %c0_66 = arith.constant 0 : index
        %68 = vector.load %arg14[%67, %c0_65, %c0_66] : memref<64x128x128xf32, #tpu.memory_space<vmem>>, vector<1x128x128xf32>
        %69 = vector.shape_cast %68 : vector<1x128x128xf32> to vector<128x128xf32>
        %70 = vector.shape_cast %66 : vector<128x128xf32> to vector<1x128x128xf32>
        tpu.vector_store %arg14[%67, %c0_65, %c0_66], %70 {strides = array<i32>} : memref<64x128x128xf32, #tpu.memory_space<vmem>>, vector<1x128x128xf32>,
      }
      %c0_i32_55 = arith.constant 0 : i32
      %52 = arith.subi %8, %c0_i32_55 : i32
      %c1_i32_56 = arith.constant 1 : i32
      %c1_i32_57 = arith.constant 1 : i32
      %53 = arith.subi %c1_i32_56, %c1_i32_57 : i32
      %54 = arith.addi %52, %53 : i32
      %c1_i32_58 = arith.constant 1 : i32
      %55 = arith.divsi %54, %c1_i32_58 : i32
      %c1_i32_59 = arith.constant 1 : i32
      %c0_i32_60 = arith.constant 0 : i32
      %c0_i32_61 = arith.constant 0 : i32
      %56 = arith.subi %55, %c0_i32_61 : i32
      %57 = arith.addi %c0_i32_61, %56 : i32
      %c1_i32_62 = arith.constant 1 : i32
      scf.for %arg15 = %c0_i32_61 to %57 step %c1_i32_62  : i32 {
        %58 = arith.muli %arg15, %c1_i32_59 : i32
        %59 = arith.addi %c0_i32_60, %58 : i32
        %c1_63 = arith.constant 1 : index
        %c0_64 = arith.constant 0 : index
        %c0_65 = arith.constant 0 : index
        %60 = vector.load %arg11[%c1_63, %c0_64, %c0_65] : memref<2x32x128xf32, #tpu.memory_space<vmem>>, vector<1x32x128xf32>
        %61 = vector.shape_cast %60 : vector<1x32x128xf32> to vector<32x128xf32>
        %c1_66 = arith.constant 1 : index
        %c0_67 = arith.constant 0 : index
        %c0_68 = arith.constant 0 : index
        %62 = vector.load %arg12[%c1_66, %c0_67, %c0_68] : memref<2x32x128xf32, #tpu.memory_space<vmem>>, vector<1x32x128xf32>
        %63 = vector.shape_cast %62 : vector<1x32x128xf32> to vector<32x128xf32>
        %64 = arith.index_cast %59 : i32 to index
        %c0_69 = arith.constant 0 : index
        %c0_70 = arith.constant 0 : index
        %65 = vector.load %arg14[%64, %c0_69, %c0_70] : memref<64x128x128xf32, #tpu.memory_space<vmem>>, vector<1x128x128xf32>
        %66 = vector.shape_cast %65 : vector<1x128x128xf32> to vector<128x128xf32>
        %67 = arith.truncf %61 : vector<32x128xf32> to vector<32x128xbf16>
        %cst = arith.constant dense<0.000000e+00> : vector<128x128xf32>
        %68 = tpu.matmul %43, %67, %cst {dimension_numbers = #tpu.dot_dimension_numbers<[1], [0], [0], [1], [0, 0, 1, 1], [], []>} : vector<128x32xbf16>, vector<32x128xbf16>, vector<128x128xf32> -> vector<128x128xf32>
        %69 = arith.addf %66, %68 : vector<128x128xf32>
        %70 = vector.extract_strided_slice %69 {offsets = [0, 0], sizes = [96, 128], strides = [1, 1]} : vector<128x128xf32> to vector<96x128xf32>
        %cst_71 = arith.constant 5.000000e-01 : f32
        %71 = vector.broadcast %cst_71 : f32 to vector<96x128xf32>
        %72 = arith.mulf %71, %70 : vector<96x128xf32>
        %73 = math.tanh %72 : vector<96x128xf32>
        %cst_72 = arith.constant 5.000000e-01 : f32
        %74 = vector.broadcast %cst_72 : f32 to vector<96x128xf32>
        %75 = arith.mulf %74, %73 : vector<96x128xf32>
        %cst_73 = arith.constant 5.000000e-01 : f32
        %76 = vector.broadcast %cst_73 : f32 to vector<96x128xf32>
        %77 = arith.addf %75, %76 : vector<96x128xf32>
        %78 = vector.extract_strided_slice %69 {offsets = [96, 0], sizes = [32, 128], strides = [1, 1]} : vector<128x128xf32> to vector<32x128xf32>
        %79 = math.tanh %78 : vector<32x128xf32>
        %80 = vector.extract_strided_slice %77 {offsets = [32, 0], sizes = [32, 128], strides = [1, 1]} : vector<96x128xf32> to vector<32x128xf32>
        %81 = arith.mulf %80, %63 : vector<32x128xf32>
        %82 = vector.extract_strided_slice %77 {offsets = [0, 0], sizes = [32, 128], strides = [1, 1]} : vector<96x128xf32> to vector<32x128xf32>
        %83 = arith.mulf %82, %79 : vector<32x128xf32>
        %84 = arith.addf %81, %83 : vector<32x128xf32>
        %85 = vector.extract_strided_slice %77 {offsets = [64, 0], sizes = [32, 128], strides = [1, 1]} : vector<96x128xf32> to vector<32x128xf32>
        %86 = math.tanh %84 : vector<32x128xf32>
        %87 = arith.mulf %85, %86 : vector<32x128xf32>
        %88 = arith.addi %3, %59 : i32
        %89 = vector.broadcast %88 : i32 to vector<1x128xi32>
        %90 = arith.cmpi slt, %89, %9 : vector<1x128xi32>
        %cst_74 = arith.constant 0.000000e+00 : f32
        %91 = vector.shape_cast %90 : vector<1x128xi1> to vector<1x128xi1>
        %92 = vector.broadcast %91 : vector<1x128xi1> to vector<32x128xi1>
        %93 = vector.broadcast %cst_74 : f32 to vector<32x128xf32>
        %94 = arith.select %92, %87, %93 : vector<32x128xi1>, vector<32x128xf32>
        %95 = arith.index_cast %59 : i32 to index
        %c0_75 = arith.constant 0 : index
        %c0_76 = arith.constant 0 : index
        %96 = vector.load %arg13[%95, %c0_75, %c0_76] : memref<64x32x128xf32, #tpu.memory_space<vmem>>, vector<1x32x128xf32>
        %97 = vector.shape_cast %96 : vector<1x32x128xf32> to vector<32x128xf32>
        %98 = arith.addf %94, %97 : vector<32x128xf32>
        %99 = arith.index_cast %59 : i32 to index
        %c0_77 = arith.constant 0 : index
        %c0_78 = arith.constant 0 : index
        %100 = vector.load %arg8[%99, %c0_77, %c0_78] : memref<64x32x128xf32, #tpu.memory_space<vmem>>, vector<1x32x128xf32>
        %101 = vector.shape_cast %100 : vector<1x32x128xf32> to vector<32x128xf32>
        %102 = vector.shape_cast %98 : vector<32x128xf32> to vector<1x32x128xf32>
        tpu.vector_store %arg8[%99, %c0_77, %c0_78], %102 {strides = array<i32>} : memref<64x32x128xf32, #tpu.memory_space<vmem>>, vector<1x32x128xf32>,
        %103 = vector.shape_cast %90 : vector<1x128xi1> to vector<1x128xi1>
        %104 = vector.broadcast %103 : vector<1x128xi1> to vector<32x128xi1>
        %105 = arith.select %104, %87, %61 : vector<32x128xi1>, vector<32x128xf32>
        %c1_79 = arith.constant 1 : index
        %c0_80 = arith.constant 0 : index
        %c0_81 = arith.constant 0 : index
        %106 = vector.load %arg11[%c1_79, %c0_80, %c0_81] : memref<2x32x128xf32, #tpu.memory_space<vmem>>, vector<1x32x128xf32>
        %107 = vector.shape_cast %106 : vector<1x32x128xf32> to vector<32x128xf32>
        %108 = vector.shape_cast %105 : vector<32x128xf32> to vector<1x32x128xf32>
        tpu.vector_store %arg11[%c1_79, %c0_80, %c0_81], %108 {strides = array<i32>} : memref<2x32x128xf32, #tpu.memory_space<vmem>>, vector<1x32x128xf32>,
        %109 = vector.shape_cast %90 : vector<1x128xi1> to vector<1x128xi1>
        %110 = vector.broadcast %109 : vector<1x128xi1> to vector<32x128xi1>
        %111 = arith.select %110, %84, %63 : vector<32x128xi1>, vector<32x128xf32>
        %c1_82 = arith.constant 1 : index
        %c0_83 = arith.constant 0 : index
        %c0_84 = arith.constant 0 : index
        %112 = vector.load %arg12[%c1_82, %c0_83, %c0_84] : memref<2x32x128xf32, #tpu.memory_space<vmem>>, vector<1x32x128xf32>
        %113 = vector.shape_cast %112 : vector<1x32x128xf32> to vector<32x128xf32>
        %114 = vector.shape_cast %111 : vector<32x128xf32> to vector<1x32x128xf32>
        tpu.vector_store %arg12[%c1_82, %c0_83, %c0_84], %114 {strides = array<i32>} : memref<2x32x128xf32, #tpu.memory_space<vmem>>, vector<1x32x128xf32>,
      }
    } else {
    }
    %c0_i32_12 = arith.constant 0 : i32
    %19 = arith.cmpi eq, %arg1, %c0_i32_12 : i32
    %20 = arith.extui %19 : i1 to i32
    %c0_i32_13 = arith.constant 0 : i32
    %21 = arith.cmpi ne, %20, %c0_i32_13 : i32
    scf.if %21 {
      %c1 = arith.constant 1 : index
      %c0_14 = arith.constant 0 : index
      %c0_15 = arith.constant 0 : index
      %22 = vector.load %arg11[%c1, %c0_14, %c0_15] : memref<2x32x128xf32, #tpu.memory_space<vmem>>, vector<1x32x128xf32>
      %23 = vector.shape_cast %22 : vector<1x32x128xf32> to vector<32x128xf32>
      %c0_16 = arith.constant 0 : index
      %c0_17 = arith.constant 0 : index
      %24 = vector.load %arg9[%c0_16, %c0_17] : memref<32x128xf32, #tpu.memory_space<vmem>>, vector<32x128xf32>
      tpu.vector_store %arg9[%c0_16, %c0_17], %23 {strides = array<i32>} : memref<32x128xf32, #tpu.memory_space<vmem>>, vector<32x128xf32>,
      %c1_18 = arith.constant 1 : index
      %c0_19 = arith.constant 0 : index
      %c0_20 = arith.constant 0 : index
      %25 = vector.load %arg12[%c1_18, %c0_19, %c0_20] : memref<2x32x128xf32, #tpu.memory_space<vmem>>, vector<1x32x128xf32>
      %26 = vector.shape_cast %25 : vector<1x32x128xf32> to vector<32x128xf32>
      %c0_21 = arith.constant 0 : index
      %c0_22 = arith.constant 0 : index
      %27 = vector.load %arg10[%c0_21, %c0_22] : memref<32x128xf32, #tpu.memory_space<vmem>>, vector<32x128xf32>
      tpu.vector_store %arg10[%c0_21, %c0_22], %26 {strides = array<i32>} : memref<32x128xf32, #tpu.memory_space<vmem>>, vector<32x128xf32>,
    } else {
    }
    return
  }
  func.func @transform_0(%arg0: i32, %arg1: i32, %arg2: memref<1xi32, #tpu.memory_space<smem>>) -> (i32, i32, i32) {
    %c0_i32 = arith.constant 0 : i32
    %c0_i32_0 = arith.constant 0 : i32
    return %arg1, %c0_i32, %arg0 : i32, i32, i32
  }
  func.func @transform_1(%arg0: i32, %arg1: i32, %arg2: memref<1xi32, #tpu.memory_space<smem>>) -> (i32, i32, i32) {
    %c0_i32 = arith.constant 0 : i32
    %c0_i32_0 = arith.constant 0 : i32
    %c0_i32_1 = arith.constant 0 : i32
    %c0_i32_2 = arith.constant 0 : i32
    return %c0_i32, %c0_i32_0, %c0_i32_1 : i32, i32, i32
  }
  func.func @transform_2(%arg0: i32, %arg1: i32, %arg2: memref<1xi32, #tpu.memory_space<smem>>) -> (i32, i32, i32) {
    %c0_i32 = arith.constant 0 : i32
    %c0_i32_0 = arith.constant 0 : i32
    %c0_i32_1 = arith.constant 0 : i32
    %c0_i32_2 = arith.constant 0 : i32
    return %c0_i32, %c0_i32_0, %c0_i32_1 : i32, i32, i32
  }
  func.func @transform_3(%arg0: i32, %arg1: i32, %arg2: memref<1xi32, #tpu.memory_space<smem>>) -> (i32, i32, i32) {
    %c0_i32 = arith.constant 0 : i32
    %c0_i32_0 = arith.constant 0 : i32
    %c0_i32_1 = arith.constant 0 : i32
    %c0_i32_2 = arith.constant 0 : i32
    return %c0_i32, %c0_i32_0, %c0_i32_1 : i32, i32, i32
  }
  func.func @transform_4(%arg0: i32, %arg1: i32, %arg2: memref<1xi32, #tpu.memory_space<smem>>) -> (i32, i32) {
    %c0_i32 = arith.constant 0 : i32
    %c0_i32_0 = arith.constant 0 : i32
    return %c0_i32, %arg0 : i32, i32
  }
  func.func @transform_5(%arg0: i32, %arg1: i32, %arg2: memref<1xi32, #tpu.memory_space<smem>>) -> (i32, i32, i32) {
    %c0_i32 = arith.constant 0 : i32
    %c0_i32_0 = arith.constant 0 : i32
    return %arg1, %c0_i32, %arg0 : i32, i32, i32
  }
  func.func @transform_6(%arg0: i32, %arg1: i32, %arg2: memref<1xi32, #tpu.memory_space<smem>>) -> (i32, i32) {
    %c0_i32 = arith.constant 0 : i32
    %c0_i32_0 = arith.constant 0 : i32
    return %c0_i32, %arg0 : i32, i32
  }
  func.func @transform_7(%arg0: i32, %arg1: i32, %arg2: memref<1xi32, #tpu.memory_space<smem>>) -> (i32, i32) {
    %c0_i32 = arith.constant 0 : i32
    %c0_i32_0 = arith.constant 0 : i32
    return %c0_i32, %arg0 : i32, i32
  }
}

</mosaic_0001>

<llo_original>
// kernel: sbt_encoder_forward.1
$region0: #{sbt_encoder_forward.1}
  #allocation0 [shape = 'u32[]', space=smem, size = 0x4, offset = 0x4, fixed_abs, tag = 'smem constant byte address 0x4 - core index']
  #allocation1 [shape = 'u32[72,128]{1,0:T(1,128)}', space=vmem, size = 0x9000, scoped, tag = 'internal scratch']
  #allocation2 [shape = 'f32[2,32,128]{2,1,0:T(8,128)}', space=vmem, size = 0x8000, scoped, tag = 'scratch operand']
  #allocation3 [shape = 'f32[2,32,128]{2,1,0:T(8,128)}', space=vmem, size = 0x8000, scoped, tag = 'scratch operand']
  #allocation4 [shape = 'f32[64,32,128]{2,1,0:T(8,128)}', space=vmem, size = 0x100000, scoped, tag = 'scratch operand']
  #allocation5 [shape = 'f32[64,128,128]{2,1,0:T(8,128)}', space=vmem, size = 0x400000, scoped, tag = 'scratch operand']
  #allocation6 [shape = 's32[1]{0}', space=sflag, size = 0x4, scoped, tag = 'scoped memory for sbt_encoder_forward.1']
  #allocation7 [shape = 's32[1]{0:T(128)S(6)}', space=smem, size = 0x200, scoped, tag = 'prefetched SMEM operand 0']
  %s0 = inlined_call_operand.<no memory space> [shape: s32[1], index: 0, kind: input, shape index: {}]
  %s1 = inlined_call_operand.vmem [shape: f32[64,32,128], index: 1, kind: input, shape index: {}]
  %s2 = inlined_call_operand.vmem [shape: bf16[2,128,32], index: 2, kind: input, shape index: {}]
  %s3 = inlined_call_operand.vmem [shape: bf16[2,128,32], index: 3, kind: input, shape index: {}]
  %s4 = inlined_call_operand.vmem [shape: f32[2,128,1], index: 4, kind: input, shape index: {}]
  %s5 = inlined_call_operand.vmem [shape: s32[1,128], index: 5, kind: input, shape index: {}]
  %s6 = inlined_call_operand.vmem [shape: f32[64,32,128], index: 6, kind: output, shape index: {0}]
  %s7 = inlined_call_operand.vmem [shape: f32[32,128], index: 7, kind: output, shape index: {1}]
  %s8 = inlined_call_operand.vmem [shape: f32[32,128], index: 8, kind: output, shape index: {2}]
  %9 = xla_tuple %s6, %s7, %s8
  %s10 = sld [smem:[#allocation0]]
  $region93: #{sbt_encoder_forward.1} parent=0
    _
  %s12 = ssub.s32 1, %s10
  %s13 = scalar_select 0, %s12, %s10
  %14 = sst [smem:[#allocation7]] %s0
  // Predicated region
  $region2: #{sbt_encoder_forward.1} parent=0 // pred_check
    _
  $region3: #{sbt_encoder_forward.1} parent=0 // pred_check_branch
    %16 = sbr.rel (0) target = $region5
  $region4: #{sbt_encoder_forward.1} parent=0 // pred_region
    _
  $region5: #{sbt_encoder_forward.1} parent=0 // pred_fallthru
    _
  // Predicated region
  $region6: #{sbt_encoder_forward.1} parent=0 // pred_check
    _
  $region7: #{sbt_encoder_forward.1} parent=0 // pred_check_branch
    %18 = sbr.rel (0) target = $region9
  $region8: #{sbt_encoder_forward.1} parent=0 // pred_region
    _
  $region9: #{sbt_encoder_forward.1} parent=0 // pred_fallthru
    _
  // Predicated region
  $region10: #{sbt_encoder_forward.1} parent=0 // pred_check
    _
  $region11: #{sbt_encoder_forward.1} parent=0 // pred_check_branch
    %20 = sbr.rel (0) target = $region13
  $region12: #{sbt_encoder_forward.1} parent=0 // pred_region
    _
  $region13: #{sbt_encoder_forward.1} parent=0 // pred_fallthru
    _
  // Predicated region
  $region14: #{sbt_encoder_forward.1} parent=0 // pred_check
    _
  $region15: #{sbt_encoder_forward.1} parent=0 // pred_check_branch
    %22 = sbr.rel (0) target = $region17
  $region16: #{sbt_encoder_forward.1} parent=0 // pred_region
    _
  $region17: #{sbt_encoder_forward.1} parent=0 // pred_fallthru
    _
  // Predicated region
  $region18: #{sbt_encoder_forward.1} parent=0 // pred_check
    _
  $region19: #{sbt_encoder_forward.1} parent=0 // pred_check_branch
    %24 = sbr.rel (0) target = $region21
  $region20: #{sbt_encoder_forward.1} parent=0 // pred_region
    _
  $region21: #{sbt_encoder_forward.1} parent=0 // pred_fallthru
    _
  %p26 = scmp.eq.s32.totalorder 0, 0
  // Predicated region
  $region22: #{sbt_encoder_forward.1} parent=0 // pred_check
    %p27 = pneg %p26
  $region23: #{sbt_encoder_forward.1} parent=0 // pred_check_branch
    %29 = sbr.rel (%p27) target = $region25
  $region24: #{sbt_encoder_forward.1} parent=0 // pred_region
    %30 = vst [vmem:[#allocation2] sm:$0xff] 0.0
    %31 = vst [vmem:[#allocation2 + $0x8] sm:$0xff] 0.0
    %32 = vst [vmem:[#allocation2 + $0x10] sm:$0xff] 0.0
    %33 = vst [vmem:[#allocation2 + $0x18] sm:$0xff] 0.0
    %34 = vst [vmem:[#allocation2 + $0x20] sm:$0xff] 0.0
    %35 = vst [vmem:[#allocation2 + $0x28] sm:$0xff] 0.0
    %36 = vst [vmem:[#allocation2 + $0x30] sm:$0xff] 0.0
    %37 = vst [vmem:[#allocation2 + $0x38] sm:$0xff] 0.0
    %38 = vst [vmem:[#allocation3] sm:$0xff] 0.0
    %39 = vst [vmem:[#allocation3 + $0x8] sm:$0xff] 0.0
    %40 = vst [vmem:[#allocation3 + $0x10] sm:$0xff] 0.0
    %41 = vst [vmem:[#allocation3 + $0x18] sm:$0xff] 0.0
    %42 = vst [vmem:[#allocation3 + $0x20] sm:$0xff] 0.0
    %43 = vst [vmem:[#allocation3 + $0x28] sm:$0xff] 0.0
    %44 = vst [vmem:[#allocation3 + $0x30] sm:$0xff] 0.0
    %45 = vst [vmem:[#allocation3 + $0x38] sm:$0xff] 0.0
  $region25: #{sbt_encoder_forward.1} parent=0 // pred_fallthru
    _
  %s46 = smul.u32 0, 64
  %s47 = sld [smem:[#allocation7]]
  %s48 = ssub.s32 %s47, %s46
  %p49 = scmp.gt.s32.totalorder %s48, 0
  %s50 = scalar_select %p49, %s48, 0
  %p51 = scmp.lt.s32.totalorder %s50, 64
  %s52 = scalar_select %p51, %s50, 64
  %v53 = vld [vmem:[%s5] sm:$0x1]
  %s54 = ssub.s32 64, %s52
  // While loop
  $region26: #{sbt_encoder_forward.1} parent=0 // loop_pre_header
    _
  $region27: #{sbt_encoder_forward.1} parent=0 // loop_header
    %s56 = sphi 0, %s58
    %p57 = scmp.ge.s32.totalorder %s56, %s54
  $region28: #{sbt_encoder_forward.1} parent=0 // loop_header_branch
    %60 = sbr.rel (%p57) target = $region32
  $region29: #{sbt_encoder_forward.1} parent=0 // loop_body
    %s61 = sadd.s32 %s52, %s56
    %s62 = smul.u32 %s61, 32
    %s63 = scalar_lea.vmem %s1, %s62
    %v64 = vld [vmem:[%s63] sm:$0xff]
    %v65 = vld [vmem:[%s63 + $0x8] sm:$0xff]
    %v66 = vld [vmem:[%s63 + $0x10] sm:$0xff]
    %v67 = vld [vmem:[%s63 + $0x18] sm:$0xff]
    %s68 = scalar_lea.vmem %s6, %s62
    %69 = vst [vmem:[%s68] sm:$0xff] %v64
    %70 = vst [vmem:[%s68 + $0x8] sm:$0xff] %v65
    %71 = vst [vmem:[%s68 + $0x10] sm:$0xff] %v66
    %72 = vst [vmem:[%s68 + $0x18] sm:$0xff] %v67
  $region30: #{sbt_encoder_forward.1} parent=0 // loop_footer
    %s58 = sadd.s32 %s56, 1
  $region31: #{sbt_encoder_forward.1} parent=0 // loop_footer_branch
    %55 = sbr.rel target = $region27
  $region32: #{sbt_encoder_forward.1} parent=0 // loop_exit
    _
  %p73 = scmp.gt.s32.totalorder %s52, 0
  // Predicated region
  $region33: #{sbt_encoder_forward.1} parent=0 // pred_check
    %p74 = pneg %p73
  $region34: #{sbt_encoder_forward.1} parent=0 // pred_check_branch
    %76 = sbr.rel (%p74) target = $region36
  $region35: #{sbt_encoder_forward.1} parent=0 // pred_region
    %v77 = vld [vmem:[%s2] sm:$0xf]
    %v78 = vld [vmem:[%s2 + $0x4] sm:$0xf]
    %v79 = vld [vmem:[%s2 + $0x8] sm:$0xf]
    %v80 = vld [vmem:[%s2 + $0xc] sm:$0xf]
    %v81 = vld [vmem:[%s2 + $0x10] sm:$0xf]
    %v82 = vld [vmem:[%s2 + $0x14] sm:$0xf]
    %v83 = vld [vmem:[%s2 + $0x18] sm:$0xf]
    %v84 = vld [vmem:[%s2 + $0x1c] sm:$0xf]
    %v85 = vld [vmem:[%s2 + $0x20] sm:$0xf]
    %v86 = vld [vmem:[%s2 + $0x24] sm:$0xf]
    %v87 = vld [vmem:[%s2 + $0x28] sm:$0xf]
    %v88 = vld [vmem:[%s2 + $0x2c] sm:$0xf]
    %v89 = vld [vmem:[%s2 + $0x30] sm:$0xf]
    %v90 = vld [vmem:[%s2 + $0x34] sm:$0xf]
    %v91 = vld [vmem:[%s2 + $0x38] sm:$0xf]
    %v92 = vld [vmem:[%s2 + $0x3c] sm:$0xf]
    %v93 = vld [vmem:[%s3] sm:$0xf]
    %v94 = vld [vmem:[%s3 + $0x4] sm:$0xf]
    %v95 = vld [vmem:[%s3 + $0x8] sm:$0xf]
    %v96 = vld [vmem:[%s3 + $0xc] sm:$0xf]
    %v97 = vld [vmem:[%s3 + $0x10] sm:$0xf]
    %v98 = vld [vmem:[%s3 + $0x14] sm:$0xf]
    %v99 = vld [vmem:[%s3 + $0x18] sm:$0xf]
    %v100 = vld [vmem:[%s3 + $0x1c] sm:$0xf]
    %v101 = vld [vmem:[%s3 + $0x20] sm:$0xf]
    %v102 = vld [vmem:[%s3 + $0x24] sm:$0xf]
    %v103 = vld [vmem:[%s3 + $0x28] sm:$0xf]
    %v104 = vld [vmem:[%s3 + $0x2c] sm:$0xf]
    %v105 = vld [vmem:[%s3 + $0x30] sm:$0xf]
    %v106 = vld [vmem:[%s3 + $0x34] sm:$0xf]
    %v107 = vld [vmem:[%s3 + $0x38] sm:$0xf]
    %v108 = vld [vmem:[%s3 + $0x3c] sm:$0xf]
    %v109 = vld [vmem:[%s4] sm:$0xff]
    %v110 = vld [vmem:[%s4 + $0x8] sm:$0xff]
    %v111 = vld [vmem:[%s4 + $0x10] sm:$0xff]
    %v112 = vld [vmem:[%s4 + $0x18] sm:$0xff]
    %v113 = vld [vmem:[%s4 + $0x20] sm:$0xff]
    %v114 = vld [vmem:[%s4 + $0x28] sm:$0xff]
    %v115 = vld [vmem:[%s4 + $0x30] sm:$0xff]
    %v116 = vld [vmem:[%s4 + $0x38] sm:$0xff]
    %v117 = vld [vmem:[%s4 + $0x40] sm:$0xff]
    %v118 = vld [vmem:[%s4 + $0x48] sm:$0xff]
    %v119 = vld [vmem:[%s4 + $0x50] sm:$0xff]
    %v120 = vld [vmem:[%s4 + $0x58] sm:$0xff]
    %v121 = vld [vmem:[%s4 + $0x60] sm:$0xff]
    %v122 = vld [vmem:[%s4 + $0x68] sm:$0xff]
    %v123 = vld [vmem:[%s4 + $0x70] sm:$0xff]
    %v124 = vld [vmem:[%s4 + $0x78] sm:$0xff]
    // While loop
    $region37: #{sbt_encoder_forward.1} parent=35 // loop_pre_header
      _
    $region38: #{sbt_encoder_forward.1} parent=35 // loop_header
      %s126 = sphi 0, %s128
      %p127 = scmp.ge.s32.totalorder %s126, %s52
    $region39: #{sbt_encoder_forward.1} parent=35 // loop_header_branch
      %130 = sbr.rel (%p127) target = $region43
    $region40: #{sbt_encoder_forward.1} parent=35 // loop_body
      %s131 = smul.u32 %s126, 32
      %s132 = scalar_lea.vmem %s1, %s131
      %v133 = vld [vmem:[%s132] sm:$0xff]
      %v134 = vld [vmem:[%s132 + $0x8] sm:$0xff]
      %v135 = vld [vmem:[%s132 + $0x10] sm:$0xff]
      %v136 = vld [vmem:[%s132 + $0x18] sm:$0xff]
      %v137 = vpack.c.bf16 %v134, %v133
      %v138 = vpack.c.bf16 %v136, %v135
      %140 = vset.pattern.permute.xlu0 0
      %141 = vperm.xlu0 %140, %v109
      %v142 = vpop.permute.xlu0 %141
      %145 = vset.pattern.permute.xlu0 0
      %146 = vperm.xlu0 %145, %v110
      %v147 = vpop.permute.xlu0 %146
      %150 = vset.pattern.permute.xlu0 0
      %151 = vperm.xlu0 %150, %v111
      %v152 = vpop.permute.xlu0 %151
      %155 = vset.pattern.permute.xlu0 0
      %156 = vperm.xlu0 %155, %v112
      %v157 = vpop.permute.xlu0 %156
      %160 = vset.pattern.permute.xlu0 0
      %161 = vperm.xlu0 %160, %v113
      %v162 = vpop.permute.xlu0 %161
      %165 = vset.pattern.permute.xlu0 0
      %166 = vperm.xlu0 %165, %v114
      %v167 = vpop.permute.xlu0 %166
      %170 = vset.pattern.permute.xlu0 0
      %171 = vperm.xlu0 %170, %v115
      %v172 = vpop.permute.xlu0 %171
      %175 = vset.pattern.permute.xlu0 0
      %176 = vperm.xlu0 %175, %v116
      %v177 = vpop.permute.xlu0 %176
      %180 = vset.pattern.permute.xlu0 0
      %181 = vperm.xlu0 %180, %v117
      %v182 = vpop.permute.xlu0 %181
      %185 = vset.pattern.permute.xlu0 0
      %186 = vperm.xlu0 %185, %v118
      %v187 = vpop.permute.xlu0 %186
      %190 = vset.pattern.permute.xlu0 0
      %191 = vperm.xlu0 %190, %v119
      %v192 = vpop.permute.xlu0 %191
      %195 = vset.pattern.permute.xlu0 0
      %196 = vperm.xlu0 %195, %v120
      %v197 = vpop.permute.xlu0 %196
      %200 = vset.pattern.permute.xlu0 0
      %201 = vperm.xlu0 %200, %v121
      %v202 = vpop.permute.xlu0 %201
      %205 = vset.pattern.permute.xlu0 0
      %206 = vperm.xlu0 %205, %v122
      %v207 = vpop.permute.xlu0 %206
      %210 = vset.pattern.permute.xlu0 0
      %211 = vperm.xlu0 %210, %v123
      %v212 = vpop.permute.xlu0 %211
      %215 = vset.pattern.permute.xlu0 0
      %216 = vperm.xlu0 %215, %v124
      %v217 = vpop.permute.xlu0 %216
      %v235 = vunpack.c.l.b16 %v77
      %v236 = vunpack.c.l.b16 %v78
      %v237 = vunpack.c.l.b16 %v79
      %v238 = vunpack.c.l.b16 %v80
      %v239 = vunpack.c.l.b16 %v81
      %v240 = vunpack.c.l.b16 %v82
      %v241 = vunpack.c.l.b16 %v83
      %v242 = vunpack.c.l.b16 %v84
      %v243 = vunpack.c.l.b16 %v85
      %v244 = vunpack.c.l.b16 %v86
      %v245 = vunpack.c.l.b16 %v87
      %v246 = vunpack.c.l.b16 %v88
      %v247 = vunpack.c.l.b16 %v89
      %v248 = vunpack.c.l.b16 %v90
      %v249 = vunpack.c.l.b16 %v91
      %v250 = vunpack.c.l.b16 %v92
      %v251 = vpack.c.b16 %v236, %v235
      %v252 = vpack.c.b16 %v238, %v237
      %v253 = vpack.c.b16 %v240, %v239
      %v254 = vpack.c.b16 %v242, %v241
      %v255 = vpack.c.b16 %v244, %v243
      %v256 = vpack.c.b16 %v246, %v245
      %v257 = vpack.c.b16 %v248, %v247
      %v258 = vpack.c.b16 %v250, %v249
      %vm259 = vcmask 261120
      %v261 = vsel %vm259, %v251, 0
      %v264 = vsel %vm259, %v252, 0
      %v267 = vsel %vm259, %v253, 0
      %v270 = vsel %vm259, %v254, 0
      %v273 = vsel %vm259, %v255, 0
      %v276 = vsel %vm259, %v256, 0
      %v279 = vsel %vm259, %v257, 0
      %v282 = vsel %vm259, %v258, 0
      %284 = vmatpush.bf16.msra.mxu0 0
      %285 = vmatpush.bf16.msra.mxu0 0
      %286 = vmatpush.bf16.msra.mxu0 0
      %287 = vmatpush.bf16.msra.mxu0 0
      %288 = vmatpush.bf16.msra.mxu0 0
      %289 = vmatpush.bf16.msra.mxu0 0
      %290 = vmatpush.bf16.msra.mxu0 %v138
      %291 = vmatpush.bf16.msra.mxu0 %v137
      %292 = vmatmul.bf16.gmra.mxu0 %v261
      %v293 = vpop.f32.mrf.mxu0
      %v294 = vadd.f32 %v142, %v293
      %v295 = vpop.f32.mrf.mxu0
      %v296 = vadd.f32 %v147, %v295
      %297 = vmatmul.bf16.gmra.mxu0 %v264
      %v298 = vpop.f32.mrf.mxu0
      %v299 = vadd.f32 %v152, %v298
      %v300 = vpop.f32.mrf.mxu0
      %v301 = vadd.f32 %v157, %v300
      %302 = vmatmul.bf16.gmra.mxu0 %v267
      %v303 = vpop.f32.mrf.mxu0
      %v304 = vadd.f32 %v162, %v303
      %v305 = vpop.f32.mrf.mxu0
      %v306 = vadd.f32 %v167, %v305
      %307 = vmatmul.bf16.gmra.mxu0 %v270
      %v308 = vpop.f32.mrf.mxu0
      %v309 = vadd.f32 %v172, %v308
      %v310 = vpop.f32.mrf.mxu0
      %v311 = vadd.f32 %v177, %v310
      %312 = vmatmul.bf16.gmra.mxu0 %v273
      %v313 = vpop.f32.mrf.mxu0
      %v314 = vadd.f32 %v182, %v313
      %v315 = vpop.f32.mrf.mxu0
      %v316 = vadd.f32 %v187, %v315
      %317 = vmatmul.bf16.gmra.mxu0 %v276
      %v318 = vpop.f32.mrf.mxu0
      %v319 = vadd.f32 %v192, %v318
      %v320 = vpop.f32.mrf.mxu0
      %v321 = vadd.f32 %v197, %v320
      %322 = vmatmul.bf16.gmra.mxu0 %v279
      %v323 = vpop.f32.mrf.mxu0
      %v324 = vadd.f32 %v202, %v323
      %v325 = vpop.f32.mrf.mxu0
      %v326 = vadd.f32 %v207, %v325
      %327 = vmatmul.bf16.gmra.mxu0 %v282
      %v328 = vpop.f32.mrf.mxu0
      %v329 = vadd.f32 %v212, %v328
      %v330 = vpop.f32.mrf.mxu0
      %v331 = vadd.f32 %v217, %v330
      %332 = vdwg.mxu0
      %s333 = smul.u32 %s126, 128
      %s334 = scalar_lea.vmem [#allocation5], %s333
      %335 = vst [vmem:[%s334] sm:$0xff] %v294
      %336 = vst [vmem:[%s334 + $0x8] sm:$0xff] %v296
      %337 = vst [vmem:[%s334 + $0x10] sm:$0xff] %v299
      %338 = vst [vmem:[%s334 + $0x18] sm:$0xff] %v301
      %339 = vst [vmem:[%s334 + $0x20] sm:$0xff] %v304
      %340 = vst [vmem:[%s334 + $0x28] sm:$0xff] %v306
      %341 = vst [vmem:[%s334 + $0x30] sm:$0xff] %v309
      %342 = vst [vmem:[%s334 + $0x38] sm:$0xff] %v311
      %343 = vst [vmem:[%s334 + $0x40] sm:$0xff] %v314
      %344 = vst [vmem:[%s334 + $0x48] sm:$0xff] %v316
      %345 = vst [vmem:[%s334 + $0x50] sm:$0xff] %v319
      %346 = vst [vmem:[%s334 + $0x58] sm:$0xff] %v321
      %347 = vst [vmem:[%s334 + $0x60] sm:$0xff] %v324
      %348 = vst [vmem:[%s334 + $0x68] sm:$0xff] %v326
      %349 = vst [vmem:[%s334 + $0x70] sm:$0xff] %v329
      %350 = vst [vmem:[%s334 + $0x78] sm:$0xff] %v331
    $region41: #{sbt_encoder_forward.1} parent=35 // loop_footer
      %s128 = sadd.s32 %s126, 1
    $region42: #{sbt_encoder_forward.1} parent=35 // loop_footer_branch
      %125 = sbr.rel target = $region38
    $region43: #{sbt_encoder_forward.1} parent=35 // loop_exit
      _
    // While loop
    $region44: #{sbt_encoder_forward.1} parent=35 // loop_pre_header
      _
    $region45: #{sbt_encoder_forward.1} parent=35 // loop_header
      %s352 = sphi 0, %s354
      %p353 = scmp.ge.s32.totalorder %s352, %s52
    $region46: #{sbt_encoder_forward.1} parent=35 // loop_header_branch
      %356 = sbr.rel (%p353) target = $region50
    $region47: #{sbt_encoder_forward.1} parent=35 // loop_body
      %v357 = vld [vmem:[#allocation2] sm:$0xff]
      %v358 = vld [vmem:[#allocation2 + $0x8] sm:$0xff]
      %v359 = vld [vmem:[#allocation2 + $0x10] sm:$0xff]
      %v360 = vld [vmem:[#allocation2 + $0x18] sm:$0xff]
      %v361 = vld [vmem:[#allocation3] sm:$0xff]
      %v362 = vld [vmem:[#allocation3 + $0x8] sm:$0xff]
      %v363 = vld [vmem:[#allocation3 + $0x10] sm:$0xff]
      %v364 = vld [vmem:[#allocation3 + $0x18] sm:$0xff]
      %s365 = smul.u32 %s352, 128
      %s366 = scalar_lea.vmem [#allocation5], %s365
      %v367 = vld [vmem:[%s366] sm:$0xff]
      %v368 = vld [vmem:[%s366 + $0x8] sm:$0xff]
      %v369 = vld [vmem:[%s366 + $0x10] sm:$0xff]
      %v370 = vld [vmem:[%s366 + $0x18] sm:$0xff]
      %v371 = vld [vmem:[%s366 + $0x20] sm:$0xff]
      %v372 = vld [vmem:[%s366 + $0x28] sm:$0xff]
      %v373 = vld [vmem:[%s366 + $0x30] sm:$0xff]
      %v374 = vld [vmem:[%s366 + $0x38] sm:$0xff]
      %v375 = vld [vmem:[%s366 + $0x40] sm:$0xff]
      %v376 = vld [vmem:[%s366 + $0x48] sm:$0xff]
      %v377 = vld [vmem:[%s366 + $0x50] sm:$0xff]
      %v378 = vld [vmem:[%s366 + $0x58] sm:$0xff]
      %v379 = vld [vmem:[%s366 + $0x60] sm:$0xff]
      %v380 = vld [vmem:[%s366 + $0x68] sm:$0xff]
      %v381 = vld [vmem:[%s366 + $0x70] sm:$0xff]
      %v382 = vld [vmem:[%s366 + $0x78] sm:$0xff]
      %v383 = vpack.c.bf16 %v358, %v357
      %v384 = vpack.c.bf16 %v360, %v359
      %v401 = vunpack.c.l.b16 %v93
      %v402 = vunpack.c.l.b16 %v94
      %v403 = vunpack.c.l.b16 %v95
      %v404 = vunpack.c.l.b16 %v96
      %v405 = vunpack.c.l.b16 %v97
      %v406 = vunpack.c.l.b16 %v98
      %v407 = vunpack.c.l.b16 %v99
      %v408 = vunpack.c.l.b16 %v100
      %v409 = vunpack.c.l.b16 %v101
      %v410 = vunpack.c.l.b16 %v102
      %v411 = vunpack.c.l.b16 %v103
      %v412 = vunpack.c.l.b16 %v104
      %v413 = vunpack.c.l.b16 %v105
      %v414 = vunpack.c.l.b16 %v106
      %v415 = vunpack.c.l.b16 %v107
      %v416 = vunpack.c.l.b16 %v108
      %v417 = vpack.c.b16 %v402, %v401
      %v418 = vpack.c.b16 %v404, %v403
      %v419 = vpack.c.b16 %v406, %v405
      %v420 = vpack.c.b16 %v408, %v407
      %v421 = vpack.c.b16 %v410, %v409
      %v422 = vpack.c.b16 %v412, %v411
      %v423 = vpack.c.b16 %v414, %v413
      %v424 = vpack.c.b16 %v416, %v415
      %vm425 = vcmask 261120
      %v427 = vsel %vm425, %v417, 0
      %v430 = vsel %vm425, %v418, 0
      %v433 = vsel %vm425, %v419, 0
      %v436 = vsel %vm425, %v420, 0
      %v439 = vsel %vm425, %v421, 0
      %v442 = vsel %vm425, %v422, 0
      %v445 = vsel %vm425, %v423, 0
      %v448 = vsel %vm425, %v424, 0
      %450 = vmatpush.bf16.msra.mxu0 0
      %451 = vmatpush.bf16.msra.mxu0 0
      %452 = vmatpush.bf16.msra.mxu0 0
      %453 = vmatpush.bf16.msra.mxu0 0
      %454 = vmatpush.bf16.msra.mxu0 0
      %455 = vmatpush.bf16.msra.mxu0 0
      %456 = vmatpush.bf16.msra.mxu0 %v384
      %457 = vmatpush.bf16.msra.mxu0 %v383
      %458 = vmatmul.bf16.gmra.mxu0 %v427
      %v459 = vpop.f32.mrf.mxu0
      %v460 = vadd.f32 0.0, %v459
      %v461 = vpop.f32.mrf.mxu0
      %v462 = vadd.f32 0.0, %v461
      %463 = vmatmul.bf16.gmra.mxu0 %v430
      %v464 = vpop.f32.mrf.mxu0
      %v465 = vadd.f32 0.0, %v464
      %v466 = vpop.f32.mrf.mxu0
      %v467 = vadd.f32 0.0, %v466
      %468 = vmatmul.bf16.gmra.mxu0 %v433
      %v469 = vpop.f32.mrf.mxu0
      %v470 = vadd.f32 0.0, %v469
      %v471 = vpop.f32.mrf.mxu0
      %v472 = vadd.f32 0.0, %v471
      %473 = vmatmul.bf16.gmra.mxu0 %v436
      %v474 = vpop.f32.mrf.mxu0
      %v475 = vadd.f32 0.0, %v474
      %v476 = vpop.f32.mrf.mxu0
      %v477 = vadd.f32 0.0, %v476
      %478 = vmatmul.bf16.gmra.mxu0 %v439
      %v479 = vpop.f32.mrf.mxu0
      %v480 = vadd.f32 0.0, %v479
      %v481 = vpop.f32.mrf.mxu0
      %v482 = vadd.f32 0.0, %v481
      %483 = vmatmul.bf16.gmra.mxu0 %v442
      %v484 = vpop.f32.mrf.mxu0
      %v485 = vadd.f32 0.0, %v484
      %v486 = vpop.f32.mrf.mxu0
      %v487 = vadd.f32 0.0, %v486
      %488 = vmatmul.bf16.gmra.mxu0 %v445
      %v489 = vpop.f32.mrf.mxu0
      %v490 = vadd.f32 0.0, %v489
      %v491 = vpop.f32.mrf.mxu0
      %v492 = vadd.f32 0.0, %v491
      %493 = vmatmul.bf16.gmra.mxu0 %v448
      %v494 = vpop.f32.mrf.mxu0
      %v495 = vadd.f32 0.0, %v494
      %v496 = vpop.f32.mrf.mxu0
      %v497 = vadd.f32 0.0, %v496
      %498 = vdwg.mxu0
      %v499 = vadd.f32 %v367, %v460
      %v500 = vadd.f32 %v368, %v462
      %v501 = vadd.f32 %v369, %v465
      %v502 = vadd.f32 %v370, %v467
      %v503 = vadd.f32 %v371, %v470
      %v504 = vadd.f32 %v372, %v472
      %v505 = vadd.f32 %v373, %v475
      %v506 = vadd.f32 %v374, %v477
      %v507 = vadd.f32 %v375, %v480
      %v508 = vadd.f32 %v376, %v482
      %v509 = vadd.f32 %v377, %v485
      %v510 = vadd.f32 %v378, %v487
      %v511 = vadd.f32 %v379, %v490
      %v512 = vadd.f32 %v380, %v492
      %v513 = vadd.f32 %v381, %v495
      %v514 = vadd.f32 %v382, %v497
      %v515 = vmul.f32 %v499, 0.5
      %v516 = vmul.f32 %v500, 0.5
      %v517 = vmul.f32 %v501, 0.5
      %v518 = vmul.f32 %v502, 0.5
      %v519 = vmul.f32 %v503, 0.5
      %v520 = vmul.f32 %v504, 0.5
      %v521 = vmul.f32 %v505, 0.5
      %v522 = vmul.f32 %v506, 0.5
      %v523 = vmul.f32 %v507, 0.5
      %v524 = vmul.f32 %v508, 0.5
      %v525 = vmul.f32 %v509, 0.5
      %v526 = vmul.f32 %v510, 0.5
      %v527 = vtanh.pop %v515
      %v528 = vtanh.pop %v516
      %v529 = vtanh.pop %v517
      %v530 = vtanh.pop %v518
      %v531 = vtanh.pop %v519
      %v532 = vtanh.pop %v520
      %v533 = vtanh.pop %v521
      %v534 = vtanh.pop %v522
      %v535 = vtanh.pop %v523
      %v536 = vtanh.pop %v524
      %v537 = vtanh.pop %v525
      %v538 = vtanh.pop %v526
      %v539 = vmul.f32 %v527, 0.5
      %v540 = vmul.f32 %v528, 0.5
      %v541 = vmul.f32 %v529, 0.5
      %v542 = vmul.f32 %v530, 0.5
      %v543 = vmul.f32 %v531, 0.5
      %v544 = vmul.f32 %v532, 0.5
      %v545 = vmul.f32 %v533, 0.5
      %v546 = vmul.f32 %v534, 0.5
      %v547 = vmul.f32 %v535, 0.5
      %v548 = vmul.f32 %v536, 0.5
      %v549 = vmul.f32 %v537, 0.5
      %v550 = vmul.f32 %v538, 0.5
      %v551 = vadd.f32 %v539, 0.5
      %v552 = vadd.f32 %v540, 0.5
      %v553 = vadd.f32 %v541, 0.5
      %v554 = vadd.f32 %v542, 0.5
      %v555 = vadd.f32 %v543, 0.5
      %v556 = vadd.f32 %v544, 0.5
      %v557 = vadd.f32 %v545, 0.5
      %v558 = vadd.f32 %v546, 0.5
      %v559 = vadd.f32 %v547, 0.5
      %v560 = vadd.f32 %v548, 0.5
      %v561 = vadd.f32 %v549, 0.5
      %v562 = vadd.f32 %v550, 0.5
      %v563 = vtanh.pop %v511
      %v564 = vtanh.pop %v512
      %v565 = vtanh.pop %v513
      %v566 = vtanh.pop %v514
      %v567 = vmul.f32 %v555, %v361
      %v568 = vmul.f32 %v556, %v362
      %v569 = vmul.f32 %v557, %v363
      %v570 = vmul.f32 %v558, %v364
      %v571 = vmul.f32 %v551, %v563
      %v572 = vmul.f32 %v552, %v564
      %v573 = vmul.f32 %v553, %v565
      %v574 = vmul.f32 %v554, %v566
      %v575 = vadd.f32 %v567, %v571
      %v576 = vadd.f32 %v568, %v572
      %v577 = vadd.f32 %v569, %v573
      %v578 = vadd.f32 %v570, %v574
      %v579 = vtanh.pop %v575
      %v580 = vtanh.pop %v576
      %v581 = vtanh.pop %v577
      %v582 = vtanh.pop %v578
      %v583 = vmul.f32 %v559, %v579
      %v584 = vmul.f32 %v560, %v580
      %v585 = vmul.f32 %v561, %v581
      %v586 = vmul.f32 %v562, %v582
      %s587 = sadd.s32 %s46, %s352
      %v588 = vstv %s587
      %vm589 = vcmp.lt.s32.totalorder %v588, %v53
      %v590 = vsel %vm589, 1, 0
      %v591 = vperm.slane %v590, 0
      %vm592 = vcmp.eq.s32.totalorder %v591, 1
      %v593 = vsel %vm592, %v583, 0.0
      %v594 = vsel %vm592, %v584, 0.0
      %v595 = vsel %vm592, %v585, 0.0
      %v596 = vsel %vm592, %v586, 0.0
      %s597 = smul.u32 %s352, 32
      %s598 = scalar_lea.vmem %s1, %s597
      %v599 = vld [vmem:[%s598] sm:$0xff]
      %v600 = vld [vmem:[%s598 + $0x8] sm:$0xff]
      %v601 = vld [vmem:[%s598 + $0x10] sm:$0xff]
      %v602 = vld [vmem:[%s598 + $0x18] sm:$0xff]
      %v603 = vadd.f32 %v593, %v599
      %v604 = vadd.f32 %v594, %v600
      %v605 = vadd.f32 %v595, %v601
      %v606 = vadd.f32 %v596, %v602
      %s607 = scalar_lea.vmem [#allocation4], %s597
      %608 = vst [vmem:[%s607] sm:$0xff] %v603
      %609 = vst [vmem:[%s607 + $0x8] sm:$0xff] %v604
      %610 = vst [vmem:[%s607 + $0x10] sm:$0xff] %v605
      %611 = vst [vmem:[%s607 + $0x18] sm:$0xff] %v606
      %v612 = vsel %vm592, %v583, %v357
      %v613 = vsel %vm592, %v584, %v358
      %v614 = vsel %vm592, %v585, %v359
      %v615 = vsel %vm592, %v586, %v360
      %616 = vst [vmem:[#allocation2] sm:$0xff] %v612
      %617 = vst [vmem:[#allocation2 + $0x8] sm:$0xff] %v613
      %618 = vst [vmem:[#allocation2 + $0x10] sm:$0xff] %v614
      %619 = vst [vmem:[#allocation2 + $0x18] sm:$0xff] %v615
      %v620 = vsel %vm592, %v575, %v361
      %v621 = vsel %vm592, %v576, %v362
      %v622 = vsel %vm592, %v577, %v363
      %v623 = vsel %vm592, %v578, %v364
      %624 = vst [vmem:[#allocation3] sm:$0xff] %v620
      %625 = vst [vmem:[#allocation3 + $0x8] sm:$0xff] %v621
      %626 = vst [vmem:[#allocation3 + $0x10] sm:$0xff] %v622
      %627 = vst [vmem:[#allocation3 + $0x18] sm:$0xff] %v623
    $region48: #{sbt_encoder_forward.1} parent=35 // loop_footer
      %s354 = sadd.s32 %s352, 1
    $region49: #{sbt_encoder_forward.1} parent=35 // loop_footer_branch
      %351 = sbr.rel target = $region45
    $region50: #{sbt_encoder_forward.1} parent=35 // loop_exit
      _
    %s628 = scalar_lea.vmem %s2, 64
    %v629 = vld [vmem:[%s628] sm:$0xf]
    %v630 = vld [vmem:[%s628 + $0x4] sm:$0xf]
    %v631 = vld [vmem:[%s628 + $0x8] sm:$0xf]
    %v632 = vld [vmem:[%s628 + $0xc] sm:$0xf]
    %v633 = vld [vmem:[%s628 + $0x10] sm:$0xf]
    %v634 = vld [vmem:[%s628 + $0x14] sm:$0xf]
    %v635 = vld [vmem:[%s628 + $0x18] sm:$0xf]
    %v636 = vld [vmem:[%s628 + $0x1c] sm:$0xf]
    %v637 = vld [vmem:[%s628 + $0x20] sm:$0xf]
    %v638 = vld [vmem:[%s628 + $0x24] sm:$0xf]
    %v639 = vld [vmem:[%s628 + $0x28] sm:$0xf]
    %v640 = vld [vmem:[%s628 + $0x2c] sm:$0xf]
    %v641 = vld [vmem:[%s628 + $0x30] sm:$0xf]
    %v642 = vld [vmem:[%s628 + $0x34] sm:$0xf]
    %v643 = vld [vmem:[%s628 + $0x38] sm:$0xf]
    %v644 = vld [vmem:[%s628 + $0x3c] sm:$0xf]
    %s645 = scalar_lea.vmem %s3, 64
    %v646 = vld [vmem:[%s645] sm:$0xf]
    %v647 = vld [vmem:[%s645 + $0x4] sm:$0xf]
    %v648 = vld [vmem:[%s645 + $0x8] sm:$0xf]
    %v649 = vld [vmem:[%s645 + $0xc] sm:$0xf]
    %v650 = vld [vmem:[%s645 + $0x10] sm:$0xf]
    %v651 = vld [vmem:[%s645 + $0x14] sm:$0xf]
    %v652 = vld [vmem:[%s645 + $0x18] sm:$0xf]
    %v653 = vld [vmem:[%s645 + $0x1c] sm:$0xf]
    %v654 = vld [vmem:[%s645 + $0x20] sm:$0xf]
    %v655 = vld [vmem:[%s645 + $0x24] sm:$0xf]
    %v656 = vld [vmem:[%s645 + $0x28] sm:$0xf]
    %v657 = vld [vmem:[%s645 + $0x2c] sm:$0xf]
    %v658 = vld [vmem:[%s645 + $0x30] sm:$0xf]
    %v659 = vld [vmem:[%s645 + $0x34] sm:$0xf]
    %v660 = vld [vmem:[%s645 + $0x38] sm:$0xf]
    %v661 = vld [vmem:[%s645 + $0x3c] sm:$0xf]
    %s662 = scalar_lea.vmem %s4, 128
    %v663 = vld [vmem:[%s662] sm:$0xff]
    %v664 = vld [vmem:[%s662 + $0x8] sm:$0xff]
    %v665 = vld [vmem:[%s662 + $0x10] sm:$0xff]
    %v666 = vld [vmem:[%s662 + $0x18] sm:$0xff]
    %v667 = vld [vmem:[%s662 + $0x20] sm:$0xff]
    %v668 = vld [vmem:[%s662 + $0x28] sm:$0xff]
    %v669 = vld [vmem:[%s662 + $0x30] sm:$0xff]
    %v670 = vld [vmem:[%s662 + $0x38] sm:$0xff]
    %v671 = vld [vmem:[%s662 + $0x40] sm:$0xff]
    %v672 = vld [vmem:[%s662 + $0x48] sm:$0xff]
    %v673 = vld [vmem:[%s662 + $0x50] sm:$0xff]
    %v674 = vld [vmem:[%s662 + $0x58] sm:$0xff]
    %v675 = vld [vmem:[%s662 + $0x60] sm:$0xff]
    %v676 = vld [vmem:[%s662 + $0x68] sm:$0xff]
    %v677 = vld [vmem:[%s662 + $0x70] sm:$0xff]
    %v678 = vld [vmem:[%s662 + $0x78] sm:$0xff]
    // While loop
    $region51: #{sbt_encoder_forward.1} parent=35 // loop_pre_header
      _
    $region52: #{sbt_encoder_forward.1} parent=35 // loop_header
      %s680 = sphi 0, %s682
      %p681 = scmp.ge.s32.totalorder %s680, %s52
    $region53: #{sbt_encoder_forward.1} parent=35 // loop_header_branch
      %684 = sbr.rel (%p681) target = $region57
    $region54: #{sbt_encoder_forward.1} parent=35 // loop_body
      %s685 = smul.u32 %s680, 32
      %s686 = scalar_lea.vmem [#allocation4], %s685
      %v687 = vld [vmem:[%s686] sm:$0xff]
      %v688 = vld [vmem:[%s686 + $0x8] sm:$0xff]
      %v689 = vld [vmem:[%s686 + $0x10] sm:$0xff]
      %v690 = vld [vmem:[%s686 + $0x18] sm:$0xff]
      %v691 = vpack.c.bf16 %v688, %v687
      %v692 = vpack.c.bf16 %v690, %v689
      %694 = vset.pattern.permute.xlu0 0
      %695 = vperm.xlu0 %694, %v663
      %v696 = vpop.permute.xlu0 %695
      %699 = vset.pattern.permute.xlu0 0
      %700 = vperm.xlu0 %699, %v664
      %v701 = vpop.permute.xlu0 %700
      %704 = vset.pattern.permute.xlu0 0
      %705 = vperm.xlu0 %704, %v665
      %v706 = vpop.permute.xlu0 %705
      %709 = vset.pattern.permute.xlu0 0
      %710 = vperm.xlu0 %709, %v666
      %v711 = vpop.permute.xlu0 %710
      %714 = vset.pattern.permute.xlu0 0
      %715 = vperm.xlu0 %714, %v667
      %v716 = vpop.permute.xlu0 %715
      %719 = vset.pattern.permute.xlu0 0
      %720 = vperm.xlu0 %719, %v668
      %v721 = vpop.permute.xlu0 %720
      %724 = vset.pattern.permute.xlu0 0
      %725 = vperm.xlu0 %724, %v669
      %v726 = vpop.permute.xlu0 %725
      %729 = vset.pattern.permute.xlu0 0
      %730 = vperm.xlu0 %729, %v670
      %v731 = vpop.permute.xlu0 %730
      %734 = vset.pattern.permute.xlu0 0
      %735 = vperm.xlu0 %734, %v671
      %v736 = vpop.permute.xlu0 %735
      %739 = vset.pattern.permute.xlu0 0
      %740 = vperm.xlu0 %739, %v672
      %v741 = vpop.permute.xlu0 %740
      %744 = vset.pattern.permute.xlu0 0
      %745 = vperm.xlu0 %744, %v673
      %v746 = vpop.permute.xlu0 %745
      %749 = vset.pattern.permute.xlu0 0
      %750 = vperm.xlu0 %749, %v674
      %v751 = vpop.permute.xlu0 %750
      %754 = vset.pattern.permute.xlu0 0
      %755 = vperm.xlu0 %754, %v675
      %v756 = vpop.permute.xlu0 %755
      %759 = vset.pattern.permute.xlu0 0
      %760 = vperm.xlu0 %759, %v676
      %v761 = vpop.permute.xlu0 %760
      %764 = vset.pattern.permute.xlu0 0
      %765 = vperm.xlu0 %764, %v677
      %v766 = vpop.permute.xlu0 %765
      %769 = vset.pattern.permute.xlu0 0
      %770 = vperm.xlu0 %769, %v678
      %v771 = vpop.permute.xlu0 %770
      %v789 = vunpack.c.l.b16 %v629
      %v790 = vunpack.c.l.b16 %v630
      %v791 = vunpack.c.l.b16 %v631
      %v792 = vunpack.c.l.b16 %v632
      %v793 = vunpack.c.l.b16 %v633
      %v794 = vunpack.c.l.b16 %v634
      %v795 = vunpack.c.l.b16 %v635
      %v796 = vunpack.c.l.b16 %v636
      %v797 = vunpack.c.l.b16 %v637
      %v798 = vunpack.c.l.b16 %v638
      %v799 = vunpack.c.l.b16 %v639
      %v800 = vunpack.c.l.b16 %v640
      %v801 = vunpack.c.l.b16 %v641
      %v802 = vunpack.c.l.b16 %v642
      %v803 = vunpack.c.l.b16 %v643
      %v804 = vunpack.c.l.b16 %v644
      %v805 = vpack.c.b16 %v790, %v789
      %v806 = vpack.c.b16 %v792, %v791
      %v807 = vpack.c.b16 %v794, %v793
      %v808 = vpack.c.b16 %v796, %v795
      %v809 = vpack.c.b16 %v798, %v797
      %v810 = vpack.c.b16 %v800, %v799
      %v811 = vpack.c.b16 %v802, %v801
      %v812 = vpack.c.b16 %v804, %v803
      %vm813 = vcmask 261120
      %v815 = vsel %vm813, %v805, 0
      %v818 = vsel %vm813, %v806, 0
      %v821 = vsel %vm813, %v807, 0
      %v824 = vsel %vm813, %v808, 0
      %v827 = vsel %vm813, %v809, 0
      %v830 = vsel %vm813, %v810, 0
      %v833 = vsel %vm813, %v811, 0
      %v836 = vsel %vm813, %v812, 0
      %838 = vmatpush.bf16.msra.mxu0 0
      %839 = vmatpush.bf16.msra.mxu0 0
      %840 = vmatpush.bf16.msra.mxu0 0
      %841 = vmatpush.bf16.msra.mxu0 0
      %842 = vmatpush.bf16.msra.mxu0 0
      %843 = vmatpush.bf16.msra.mxu0 0
      %844 = vmatpush.bf16.msra.mxu0 %v692
      %845 = vmatpush.bf16.msra.mxu0 %v691
      %846 = vmatmul.bf16.gmra.mxu0 %v815
      %v847 = vpop.f32.mrf.mxu0
      %v848 = vadd.f32 %v696, %v847
      %v849 = vpop.f32.mrf.mxu0
      %v850 = vadd.f32 %v701, %v849
      %851 = vmatmul.bf16.gmra.mxu0 %v818
      %v852 = vpop.f32.mrf.mxu0
      %v853 = vadd.f32 %v706, %v852
      %v854 = vpop.f32.mrf.mxu0
      %v855 = vadd.f32 %v711, %v854
      %856 = vmatmul.bf16.gmra.mxu0 %v821
      %v857 = vpop.f32.mrf.mxu0
      %v858 = vadd.f32 %v716, %v857
      %v859 = vpop.f32.mrf.mxu0
      %v860 = vadd.f32 %v721, %v859
      %861 = vmatmul.bf16.gmra.mxu0 %v824
      %v862 = vpop.f32.mrf.mxu0
      %v863 = vadd.f32 %v726, %v862
      %v864 = vpop.f32.mrf.mxu0
      %v865 = vadd.f32 %v731, %v864
      %866 = vmatmul.bf16.gmra.mxu0 %v827
      %v867 = vpop.f32.mrf.mxu0
      %v868 = vadd.f32 %v736, %v867
      %v869 = vpop.f32.mrf.mxu0
      %v870 = vadd.f32 %v741, %v869
      %871 = vmatmul.bf16.gmra.mxu0 %v830
      %v872 = vpop.f32.mrf.mxu0
      %v873 = vadd.f32 %v746, %v872
      %v874 = vpop.f32.mrf.mxu0
      %v875 = vadd.f32 %v751, %v874
      %876 = vmatmul.bf16.gmra.mxu0 %v833
      %v877 = vpop.f32.mrf.mxu0
      %v878 = vadd.f32 %v756, %v877
      %v879 = vpop.f32.mrf.mxu0
      %v880 = vadd.f32 %v761, %v879
      %881 = vmatmul.bf16.gmra.mxu0 %v836
      %v882 = vpop.f32.mrf.mxu0
      %v883 = vadd.f32 %v766, %v882
      %v884 = vpop.f32.mrf.mxu0
      %v885 = vadd.f32 %v771, %v884
      %886 = vdwg.mxu0
      %s887 = smul.u32 %s680, 128
      %s888 = scalar_lea.vmem [#allocation5], %s887
      %889 = vst [vmem:[%s888] sm:$0xff] %v848
      %890 = vst [vmem:[%s888 + $0x8] sm:$0xff] %v850
      %891 = vst [vmem:[%s888 + $0x10] sm:$0xff] %v853
      %892 = vst [vmem:[%s888 + $0x18] sm:$0xff] %v855
      %893 = vst [vmem:[%s888 + $0x20] sm:$0xff] %v858
      %894 = vst [vmem:[%s888 + $0x28] sm:$0xff] %v860
      %895 = vst [vmem:[%s888 + $0x30] sm:$0xff] %v863
      %896 = vst [vmem:[%s888 + $0x38] sm:$0xff] %v865
      %897 = vst [vmem:[%s888 + $0x40] sm:$0xff] %v868
      %898 = vst [vmem:[%s888 + $0x48] sm:$0xff] %v870
      %899 = vst [vmem:[%s888 + $0x50] sm:$0xff] %v873
      %900 = vst [vmem:[%s888 + $0x58] sm:$0xff] %v875
      %901 = vst [vmem:[%s888 + $0x60] sm:$0xff] %v878
      %902 = vst [vmem:[%s888 + $0x68] sm:$0xff] %v880
      %903 = vst [vmem:[%s888 + $0x70] sm:$0xff] %v883
      %904 = vst [vmem:[%s888 + $0x78] sm:$0xff] %v885
    $region55: #{sbt_encoder_forward.1} parent=35 // loop_footer
      %s682 = sadd.s32 %s680, 1
    $region56: #{sbt_encoder_forward.1} parent=35 // loop_footer_branch
      %679 = sbr.rel target = $region52
    $region57: #{sbt_encoder_forward.1} parent=35 // loop_exit
      _
    // While loop
    $region58: #{sbt_encoder_forward.1} parent=35 // loop_pre_header
      _
    $region59: #{sbt_encoder_forward.1} parent=35 // loop_header
      %s906 = sphi 0, %s908
      %p907 = scmp.ge.s32.totalorder %s906, %s52
    $region60: #{sbt_encoder_forward.1} parent=35 // loop_header_branch
      %910 = sbr.rel (%p907) target = $region64
    $region61: #{sbt_encoder_forward.1} parent=35 // loop_body
      %s911 = scalar_lea.vmem [#allocation2], 32
      %v912 = vld [vmem:[%s911] sm:$0xff]
      %v913 = vld [vmem:[%s911 + $0x8] sm:$0xff]
      %v914 = vld [vmem:[%s911 + $0x10] sm:$0xff]
      %v915 = vld [vmem:[%s911 + $0x18] sm:$0xff]
      %s916 = scalar_lea.vmem [#allocation3], 32
      %v917 = vld [vmem:[%s916] sm:$0xff]
      %v918 = vld [vmem:[%s916 + $0x8] sm:$0xff]
      %v919 = vld [vmem:[%s916 + $0x10] sm:$0xff]
      %v920 = vld [vmem:[%s916 + $0x18] sm:$0xff]
      %s921 = smul.u32 %s906, 128
      %s922 = scalar_lea.vmem [#allocation5], %s921
      %v923 = vld [vmem:[%s922] sm:$0xff]
      %v924 = vld [vmem:[%s922 + $0x8] sm:$0xff]
      %v925 = vld [vmem:[%s922 + $0x10] sm:$0xff]
      %v926 = vld [vmem:[%s922 + $0x18] sm:$0xff]
      %v927 = vld [vmem:[%s922 + $0x20] sm:$0xff]
      %v928 = vld [vmem:[%s922 + $0x28] sm:$0xff]
      %v929 = vld [vmem:[%s922 + $0x30] sm:$0xff]
      %v930 = vld [vmem:[%s922 + $0x38] sm:$0xff]
      %v931 = vld [vmem:[%s922 + $0x40] sm:$0xff]
      %v932 = vld [vmem:[%s922 + $0x48] sm:$0xff]
      %v933 = vld [vmem:[%s922 + $0x50] sm:$0xff]
      %v934 = vld [vmem:[%s922 + $0x58] sm:$0xff]
      %v935 = vld [vmem:[%s922 + $0x60] sm:$0xff]
      %v936 = vld [vmem:[%s922 + $0x68] sm:$0xff]
      %v937 = vld [vmem:[%s922 + $0x70] sm:$0xff]
      %v938 = vld [vmem:[%s922 + $0x78] sm:$0xff]
      %v939 = vpack.c.bf16 %v913, %v912
      %v940 = vpack.c.bf16 %v915, %v914
      %v957 = vunpack.c.l.b16 %v646
      %v958 = vunpack.c.l.b16 %v647
      %v959 = vunpack.c.l.b16 %v648
      %v960 = vunpack.c.l.b16 %v649
      %v961 = vunpack.c.l.b16 %v650
      %v962 = vunpack.c.l.b16 %v651
      %v963 = vunpack.c.l.b16 %v652
      %v964 = vunpack.c.l.b16 %v653
      %v965 = vunpack.c.l.b16 %v654
      %v966 = vunpack.c.l.b16 %v655
      %v967 = vunpack.c.l.b16 %v656
      %v968 = vunpack.c.l.b16 %v657
      %v969 = vunpack.c.l.b16 %v658
      %v970 = vunpack.c.l.b16 %v659
      %v971 = vunpack.c.l.b16 %v660
      %v972 = vunpack.c.l.b16 %v661
      %v973 = vpack.c.b16 %v958, %v957
      %v974 = vpack.c.b16 %v960, %v959
      %v975 = vpack.c.b16 %v962, %v961
      %v976 = vpack.c.b16 %v964, %v963
      %v977 = vpack.c.b16 %v966, %v965
      %v978 = vpack.c.b16 %v968, %v967
      %v979 = vpack.c.b16 %v970, %v969
      %v980 = vpack.c.b16 %v972, %v971
      %vm981 = vcmask 261120
      %v983 = vsel %vm981, %v973, 0
      %v986 = vsel %vm981, %v974, 0
      %v989 = vsel %vm981, %v975, 0
      %v992 = vsel %vm981, %v976, 0
      %v995 = vsel %vm981, %v977, 0
      %v998 = vsel %vm981, %v978, 0
      %v1001 = vsel %vm981, %v979, 0
      %v1004 = vsel %vm981, %v980, 0
      %1006 = vmatpush.bf16.msra.mxu0 0
      %1007 = vmatpush.bf16.msra.mxu0 0
      %1008 = vmatpush.bf16.msra.mxu0 0
      %1009 = vmatpush.bf16.msra.mxu0 0
      %1010 = vmatpush.bf16.msra.mxu0 0
      %1011 = vmatpush.bf16.msra.mxu0 0
      %1012 = vmatpush.bf16.msra.mxu0 %v940
      %1013 = vmatpush.bf16.msra.mxu0 %v939
      %1014 = vmatmul.bf16.gmra.mxu0 %v983
      %v1015 = vpop.f32.mrf.mxu0
      %v1016 = vadd.f32 0.0, %v1015
      %v1017 = vpop.f32.mrf.mxu0
      %v1018 = vadd.f32 0.0, %v1017
      %1019 = vmatmul.bf16.gmra.mxu0 %v986
      %v1020 = vpop.f32.mrf.mxu0
      %v1021 = vadd.f32 0.0, %v1020
      %v1022 = vpop.f32.mrf.mxu0
      %v1023 = vadd.f32 0.0, %v1022
      %1024 = vmatmul.bf16.gmra.mxu0 %v989
      %v1025 = vpop.f32.mrf.mxu0
      %v1026 = vadd.f32 0.0, %v1025
      %v1027 = vpop.f32.mrf.mxu0
      %v1028 = vadd.f32 0.0, %v1027
      %1029 = vmatmul.bf16.gmra.mxu0 %v992
      %v1030 = vpop.f32.mrf.mxu0
      %v1031 = vadd.f32 0.0, %v1030
      %v1032 = vpop.f32.mrf.mxu0
      %v1033 = vadd.f32 0.0, %v1032
      %1034 = vmatmul.bf16.gmra.mxu0 %v995
      %v1035 = vpop.f32.mrf.mxu0
      %v1036 = vadd.f32 0.0, %v1035
      %v1037 = vpop.f32.mrf.mxu0
      %v1038 = vadd.f32 0.0, %v1037
      %1039 = vmatmul.bf16.gmra.mxu0 %v998
      %v1040 = vpop.f32.mrf.mxu0
      %v1041 = vadd.f32 0.0, %v1040
      %v1042 = vpop.f32.mrf.mxu0
      %v1043 = vadd.f32 0.0, %v1042
      %1044 = vmatmul.bf16.gmra.mxu0 %v1001
      %v1045 = vpop.f32.mrf.mxu0
      %v1046 = vadd.f32 0.0, %v1045
      %v1047 = vpop.f32.mrf.mxu0
      %v1048 = vadd.f32 0.0, %v1047
      %1049 = vmatmul.bf16.gmra.mxu0 %v1004
      %v1050 = vpop.f32.mrf.mxu0
      %v1051 = vadd.f32 0.0, %v1050
      %v1052 = vpop.f32.mrf.mxu0
      %v1053 = vadd.f32 0.0, %v1052
      %1054 = vdwg.mxu0
      %v1055 = vadd.f32 %v923, %v1016
      %v1056 = vadd.f32 %v924, %v1018
      %v1057 = vadd.f32 %v925, %v1021
      %v1058 = vadd.f32 %v926, %v1023
      %v1059 = vadd.f32 %v927, %v1026
      %v1060 = vadd.f32 %v928, %v1028
      %v1061 = vadd.f32 %v929, %v1031
      %v1062 = vadd.f32 %v930, %v1033
      %v1063 = vadd.f32 %v931, %v1036
      %v1064 = vadd.f32 %v932, %v1038
      %v1065 = vadd.f32 %v933, %v1041
      %v1066 = vadd.f32 %v934, %v1043
      %v1067 = vadd.f32 %v935, %v1046
      %v1068 = vadd.f32 %v936, %v1048
      %v1069 = vadd.f32 %v937, %v1051
      %v1070 = vadd.f32 %v938, %v1053
      %v1071 = vmul.f32 %v1055, 0.5
      %v1072 = vmul.f32 %v1056, 0.5
      %v1073 = vmul.f32 %v1057, 0.5
      %v1074 = vmul.f32 %v1058, 0.5
      %v1075 = vmul.f32 %v1059, 0.5
      %v1076 = vmul.f32 %v1060, 0.5
      %v1077 = vmul.f32 %v1061, 0.5
      %v1078 = vmul.f32 %v1062, 0.5
      %v1079 = vmul.f32 %v1063, 0.5
      %v1080 = vmul.f32 %v1064, 0.5
      %v1081 = vmul.f32 %v1065, 0.5
      %v1082 = vmul.f32 %v1066, 0.5
      %v1083 = vtanh.pop %v1071
      %v1084 = vtanh.pop %v1072
      %v1085 = vtanh.pop %v1073
      %v1086 = vtanh.pop %v1074
      %v1087 = vtanh.pop %v1075
      %v1088 = vtanh.pop %v1076
      %v1089 = vtanh.pop %v1077
      %v1090 = vtanh.pop %v1078
      %v1091 = vtanh.pop %v1079
      %v1092 = vtanh.pop %v1080
      %v1093 = vtanh.pop %v1081
      %v1094 = vtanh.pop %v1082
      %v1095 = vmul.f32 %v1083, 0.5
      %v1096 = vmul.f32 %v1084, 0.5
      %v1097 = vmul.f32 %v1085, 0.5
      %v1098 = vmul.f32 %v1086, 0.5
      %v1099 = vmul.f32 %v1087, 0.5
      %v1100 = vmul.f32 %v1088, 0.5
      %v1101 = vmul.f32 %v1089, 0.5
      %v1102 = vmul.f32 %v1090, 0.5
      %v1103 = vmul.f32 %v1091, 0.5
      %v1104 = vmul.f32 %v1092, 0.5
      %v1105 = vmul.f32 %v1093, 0.5
      %v1106 = vmul.f32 %v1094, 0.5
      %v1107 = vadd.f32 %v1095, 0.5
      %v1108 = vadd.f32 %v1096, 0.5
      %v1109 = vadd.f32 %v1097, 0.5
      %v1110 = vadd.f32 %v1098, 0.5
      %v1111 = vadd.f32 %v1099, 0.5
      %v1112 = vadd.f32 %v1100, 0.5
      %v1113 = vadd.f32 %v1101, 0.5
      %v1114 = vadd.f32 %v1102, 0.5
      %v1115 = vadd.f32 %v1103, 0.5
      %v1116 = vadd.f32 %v1104, 0.5
      %v1117 = vadd.f32 %v1105, 0.5
      %v1118 = vadd.f32 %v1106, 0.5
      %v1119 = vtanh.pop %v1067
      %v1120 = vtanh.pop %v1068
      %v1121 = vtanh.pop %v1069
      %v1122 = vtanh.pop %v1070
      %v1123 = vmul.f32 %v1111, %v917
      %v1124 = vmul.f32 %v1112, %v918
      %v1125 = vmul.f32 %v1113, %v919
      %v1126 = vmul.f32 %v1114, %v920
      %v1127 = vmul.f32 %v1107, %v1119
      %v1128 = vmul.f32 %v1108, %v1120
      %v1129 = vmul.f32 %v1109, %v1121
      %v1130 = vmul.f32 %v1110, %v1122
      %v1131 = vadd.f32 %v1123, %v1127
      %v1132 = vadd.f32 %v1124, %v1128
      %v1133 = vadd.f32 %v1125, %v1129
      %v1134 = vadd.f32 %v1126, %v1130
      %v1135 = vtanh.pop %v1131
      %v1136 = vtanh.pop %v1132
      %v1137 = vtanh.pop %v1133
      %v1138 = vtanh.pop %v1134
      %v1139 = vmul.f32 %v1115, %v1135
      %v1140 = vmul.f32 %v1116, %v1136
      %v1141 = vmul.f32 %v1117, %v1137
      %v1142 = vmul.f32 %v1118, %v1138
      %s1143 = sadd.s32 %s46, %s906
      %v1144 = vstv %s1143
      %vm1145 = vcmp.lt.s32.totalorder %v1144, %v53
      %v1146 = vsel %vm1145, 1, 0
      %v1147 = vperm.slane %v1146, 0
      %vm1148 = vcmp.eq.s32.totalorder %v1147, 1
      %v1149 = vsel %vm1148, %v1139, 0.0
      %v1150 = vsel %vm1148, %v1140, 0.0
      %v1151 = vsel %vm1148, %v1141, 0.0
      %v1152 = vsel %vm1148, %v1142, 0.0
      %s1153 = smul.u32 %s906, 32
      %s1154 = scalar_lea.vmem [#allocation4], %s1153
      %v1155 = vld [vmem:[%s1154] sm:$0xff]
      %v1156 = vld [vmem:[%s1154 + $0x8] sm:$0xff]
      %v1157 = vld [vmem:[%s1154 + $0x10] sm:$0xff]
      %v1158 = vld [vmem:[%s1154 + $0x18] sm:$0xff]
      %v1159 = vadd.f32 %v1149, %v1155
      %v1160 = vadd.f32 %v1150, %v1156
      %v1161 = vadd.f32 %v1151, %v1157
      %v1162 = vadd.f32 %v1152, %v1158
      %s1163 = scalar_lea.vmem %s6, %s1153
      %1164 = vst [vmem:[%s1163] sm:$0xff] %v1159
      %1165 = vst [vmem:[%s1163 + $0x8] sm:$0xff] %v1160
      %1166 = vst [vmem:[%s1163 + $0x10] sm:$0xff] %v1161
      %1167 = vst [vmem:[%s1163 + $0x18] sm:$0xff] %v1162
      %v1168 = vsel %vm1148, %v1139, %v912
      %v1169 = vsel %vm1148, %v1140, %v913
      %v1170 = vsel %vm1148, %v1141, %v914
      %v1171 = vsel %vm1148, %v1142, %v915
      %1172 = vst [vmem:[%s911] sm:$0xff] %v1168
      %1173 = vst [vmem:[%s911 + $0x8] sm:$0xff] %v1169
      %1174 = vst [vmem:[%s911 + $0x10] sm:$0xff] %v1170
      %1175 = vst [vmem:[%s911 + $0x18] sm:$0xff] %v1171
      %v1176 = vsel %vm1148, %v1131, %v917
      %v1177 = vsel %vm1148, %v1132, %v918
      %v1178 = vsel %vm1148, %v1133, %v919
      %v1179 = vsel %vm1148, %v1134, %v920
      %1180 = vst [vmem:[%s916] sm:$0xff] %v1176
      %1181 = vst [vmem:[%s916 + $0x8] sm:$0xff] %v1177
      %1182 = vst [vmem:[%s916 + $0x10] sm:$0xff] %v1178
      %1183 = vst [vmem:[%s916 + $0x18] sm:$0xff] %v1179
    $region62: #{sbt_encoder_forward.1} parent=35 // loop_footer
      %s908 = sadd.s32 %s906, 1
    $region63: #{sbt_encoder_forward.1} parent=35 // loop_footer_branch
      %905 = sbr.rel target = $region59
    $region64: #{sbt_encoder_forward.1} parent=35 // loop_exit
      _
  $region36: #{sbt_encoder_forward.1} parent=0 // pred_fallthru
    _
  // Predicated region
  $region65: #{sbt_encoder_forward.1} parent=0 // pred_check
    %p1184 = pneg %p26
  $region66: #{sbt_encoder_forward.1} parent=0 // pred_check_branch
    %1186 = sbr.rel (%p1184) target = $region68
  $region67: #{sbt_encoder_forward.1} parent=0 // pred_region
    %s1187 = scalar_lea.vmem [#allocation2], 32
    %v1188 = vld [vmem:[%s1187] sm:$0xff]
    %v1189 = vld [vmem:[%s1187 + $0x8] sm:$0xff]
    %v1190 = vld [vmem:[%s1187 + $0x10] sm:$0xff]
    %v1191 = vld [vmem:[%s1187 + $0x18] sm:$0xff]
    %1192 = vst [vmem:[%s7] sm:$0xff] %v1188
    %1193 = vst [vmem:[%s7 + $0x8] sm:$0xff] %v1189
    %1194 = vst [vmem:[%s7 + $0x10] sm:$0xff] %v1190
    %1195 = vst [vmem:[%s7 + $0x18] sm:$0xff] %v1191
    %s1196 = scalar_lea.vmem [#allocation3], 32
    %v1197 = vld [vmem:[%s1196] sm:$0xff]
    %v1198 = vld [vmem:[%s1196 + $0x8] sm:$0xff]
    %v1199 = vld [vmem:[%s1196 + $0x10] sm:$0xff]
    %v1200 = vld [vmem:[%s1196 + $0x18] sm:$0xff]
    %1201 = vst [vmem:[%s8] sm:$0xff] %v1197
    %1202 = vst [vmem:[%s8 + $0x8] sm:$0xff] %v1198
    %1203 = vst [vmem:[%s8 + $0x10] sm:$0xff] %v1199
    %1204 = vst [vmem:[%s8 + $0x18] sm:$0xff] %v1200
  $region68: #{sbt_encoder_forward.1} parent=0 // pred_fallthru
    _
  // Predicated region
  $region69: #{sbt_encoder_forward.1} parent=0 // pred_check
    _
  $region70: #{sbt_encoder_forward.1} parent=0 // pred_check_branch
    %1206 = sbr.rel (0) target = $region72
  $region71: #{sbt_encoder_forward.1} parent=0 // pred_region
    _
  $region72: #{sbt_encoder_forward.1} parent=0 // pred_fallthru
    _
  // Predicated region
  $region73: #{sbt_encoder_forward.1} parent=0 // pred_check
    _
  $region74: #{sbt_encoder_forward.1} parent=0 // pred_check_branch
    %1208 = sbr.rel (0) target = $region76
  $region75: #{sbt_encoder_forward.1} parent=0 // pred_region
    _
  $region76: #{sbt_encoder_forward.1} parent=0 // pred_fallthru
    _
  // Predicated region
  $region77: #{sbt_encoder_forward.1} parent=0 // pred_check
    _
  $region78: #{sbt_encoder_forward.1} parent=0 // pred_check_branch
    %1210 = sbr.rel (0) target = $region80
  $region79: #{sbt_encoder_forward.1} parent=0 // pred_region
    _
  $region80: #{sbt_encoder_forward.1} parent=0 // pred_fallthru
    _
  // Predicated region
  $region81: #{sbt_encoder_forward.1} parent=0 // pred_check
    _
  $region82: #{sbt_encoder_forward.1} parent=0 // pred_check_branch
    %1212 = sbr.rel (0) target = $region84
  $region83: #{sbt_encoder_forward.1} parent=0 // pred_region
    _
  $region84: #{sbt_encoder_forward.1} parent=0 // pred_fallthru
    _
  // Predicated region
  $region85: #{sbt_encoder_forward.1} parent=0 // pred_check
    _
  $region86: #{sbt_encoder_forward.1} parent=0 // pred_check_branch
    %1214 = sbr.rel (0) target = $region88
  $region87: #{sbt_encoder_forward.1} parent=0 // pred_region
    _
  $region88: #{sbt_encoder_forward.1} parent=0 // pred_fallthru
    _
  // Predicated region
  $region89: #{sbt_encoder_forward.1} parent=0 // pred_check
    _
  $region90: #{sbt_encoder_forward.1} parent=0 // pred_check_branch
    %1216 = sbr.rel (0) target = $region92
  $region91: #{sbt_encoder_forward.1} parent=0 // pred_region
    _
  $region92: #{sbt_encoder_forward.1} parent=0 // pred_fallthru
    _

</llo_original>
